<compile_context>
chip_gen: v5e
topology: v5e:2x2
jax: 0.10.0
libtpu: 0.0.40
codegen_flags: <defaults>
</compile_context>

<pallas_src>
import functools

import jax
import jax.numpy as jnp
from jax import lax
from jax.experimental import pallas as pl
from jax.experimental.pallas import tpu as pltpu

LANES = 128
NEG_INF = -1e30


def _vmem():
    return pl.BlockSpec(memory_space=pltpu.MemorySpace.VMEM)


# ----------------------------------------------------------------------------
# Single fused kernel: entire GraphNetTwo forward
# ----------------------------------------------------------------------------
def fused_forward_kernel(x_rest_ref, mask_rest_ref, x_rig_ref, mask_rig_ref,
                         pos_ref, prm_ref, o_ref, *, off, in_dim, hidden,
                         n_heads, out_dim, enc_layers, dec_layers):
    H = hidden
    n_rest = x_rest_ref.shape[0]
    n_rig = x_rig_ref.shape[0]

    # ---- single-head GATConv (dense additive mask) fused with ReLU ---------
    def gat_relu(x, mask_add, name, in_rows):
        w_off = off[name + "_w"]
        v_off = off[name + "_v"]
        # Slab block = [W | W @ att_dst^T | zero padding] -> one lane-dense matmul
        w_aug = prm_ref[w_off:w_off + in_rows, :]                       # [in, 128]
        h_aug = jnp.dot(x, w_aug, preferred_element_type=jnp.float32)   # [N, 128]
        h = h_aug[:, 0:H]                                               # W x
        a_dst = h_aug[:, H:H + 1]                                       # att_dst . h_i (free col)
        att_src = prm_ref[v_off:v_off + 1, 0:H]
        bias = prm_ref[v_off + 1:v_off + 2, 0:H]
        # att_src . h_j -> [1, N] row, directly from the contraction (no transpose)
        a_src = lax.dot_general(att_src, h, (((1,), (1,)), ((), ())),
                                preferred_element_type=jnp.float32)
        s = a_dst + a_src                                               # [N, N]
        s = jnp.where(s > 0, s, 0.2 * s)                                # LeakyReLU(0.2)
        s = s + mask_add                                                # additive -1e30 mask
        s = s - jnp.max(s, axis=-1, keepdims=True)
        e = jnp.exp(s)
        inv = pl.reciprocal(jnp.sum(e, axis=-1, keepdims=True), approx=True)
        out = jnp.dot(e * inv, h, preferred_element_type=jnp.float32) + bias
        return jnp.maximum(out, 0.0)                                    # fused F.relu

    # ---- encoders (dropout = identity) --------------------------------------
    h_rest = x_rest_ref[...]
    mask_rest = mask_rest_ref[...]
    d = in_dim
    for l in range(enc_layers):
        h_rest = gat_relu(h_rest, mask_rest, f"enc_rest_{l}", d)
        d = H

    h_rig = x_rig_ref[...]
    mask_rig = mask_rig_ref[...]
    d = in_dim
    for l in range(enc_layers):
        h_rig = gat_relu(h_rig, mask_rig, f"enc_rig_{l}", d)
        d = H

    # ---- MultiHeadAttentionTwo: one projection matmul for q AND k ----------
    mw_off = off["mha_w"]
    mb_off = off["mha_b"]
    mha_w = prm_ref[mw_off:mw_off + H, 0:n_heads * H]                   # [H, heads*H]
    mha_b = prm_ref[mb_off:mb_off + 1, 0:n_heads * H]
    h_cat = jnp.concatenate([h_rest, h_rig], axis=0)                    # [Nr+Ng, H]
    proj = jnp.dot(h_cat, mha_w, preferred_element_type=jnp.float32) + mha_b
    q = proj[0:n_rest, :]                                               # sublane slice
    k = proj[n_rest:n_rest + n_rig, :]

    head_outs = []
    for hd in range(n_heads):
        qh = q[:, hd * H:(hd + 1) * H]
        kh = k[:, hd * H:(hd + 1) * H]
        s = lax.dot_general(qh, kh, (((1,), (1,)), ((), ())),
                            preferred_element_type=jnp.float32)         # [Nr, Ng]
        s = s - jnp.max(s, axis=-1, keepdims=True)                      # no 1/sqrt(d): matches ref
        e = jnp.exp(s)
        inv = pl.reciprocal(jnp.sum(e, axis=-1, keepdims=True), approx=True)
        head_outs.append(jnp.dot(e * inv, h_rig,
                                 preferred_element_type=jnp.float32))   # [Nr, H]
    pooled = jnp.concatenate(head_outs, axis=-1)                        # [Nr, heads*H] lane-dense

    # ---- decoder MLP: concat([h_rest, pooled]) via two partial matmuls -----
    w1_off = off["dec_0_w"]
    b1_off = off["dec_0_b"]
    y = (jnp.dot(h_rest, prm_ref[w1_off:w1_off + H, 0:H],
                 preferred_element_type=jnp.float32)
         + jnp.dot(pooled, prm_ref[w1_off + H:w1_off + H * (n_heads + 1), 0:H],
                   preferred_element_type=jnp.float32)
         + prm_ref[b1_off:b1_off + 1, 0:H])
    y = jnp.maximum(y, 0.0)                                             # ReLU; Dropout=id

    for l in range(1, dec_layers):
        w_off = off[f"dec_{l}_w"]
        b_off = off[f"dec_{l}_b"]
        y = (jnp.dot(y, prm_ref[w_off:w_off + H, 0:H],
                     preferred_element_type=jnp.float32)
             + prm_ref[b_off:b_off + 1, 0:H])
        y = jnp.maximum(y, 0.0)

    ow_off = off["out_w"]
    ob_off = off["out_b"]
    # lane-dense matmul against the zero-padded out_w block, then slice result
    x_full = jnp.dot(y, prm_ref[ow_off:ow_off + H, :],
                     preferred_element_type=jnp.float32)                # [Nr, 128]
    x_out = x_full[:, 0:out_dim] + prm_ref[ob_off:ob_off + 1, 0:out_dim]

    # ---- mode == 'res': deformed pos = pos + decoder output ----------------
    o_ref[...] = pos_ref[...] + x_out


def graph_net_two_forward(slab, off, x_resting, mask_resting, x_rigid,
                          mask_rigid, pos_resting, *, in_dim, hidden, n_heads,
                          out_dim, enc_layers, dec_layers):
    kernel = functools.partial(
        fused_forward_kernel,
        off=off, in_dim=in_dim, hidden=hidden, n_heads=n_heads,
        out_dim=out_dim, enc_layers=enc_layers, dec_layers=dec_layers,
    )
    n_rest = x_resting.shape[0]
    return pl.pallas_call(
        kernel,
        out_shape=jax.ShapeDtypeStruct((n_rest, out_dim), jnp.float32),
        in_specs=[_vmem()] * 6,
        out_specs=_vmem(),
    )(x_resting, mask_resting, x_rigid, mask_rigid, pos_resting, slab)


# ----------------------------------------------------------------------------
# Parameter init (deterministic, shapes from GraphNetTwo.__init__)
# ----------------------------------------------------------------------------
def init_params(key, in_dim, hidden, out_dim, enc_layers, dec_layers, n_heads):
    keys = iter(jax.random.split(key, 256))

    def dense(fan_in, fan_out):
        scale = 1.0 / jnp.sqrt(jnp.float32(fan_in))
        w = jax.random.uniform(next(keys), (fan_in, fan_out), jnp.float32, -scale, scale)
        b = jax.random.uniform(next(keys), (1, fan_out), jnp.float32, -scale, scale)
        return w, b

    def gat_layer(fan_in, fan_out):
        w, _ = dense(fan_in, fan_out)                        # lin (bias=False in PyG)
        att_src = jax.random.normal(next(keys), (1, fan_out), jnp.float32) * 0.1
        att_dst = jax.random.normal(next(keys), (1, fan_out), jnp.float32) * 0.1
        bias = jnp.zeros((1, fan_out), jnp.float32)
        return (w, att_src, att_dst, bias)

    enc_resting, enc_rigid = [], []
    d = in_dim
    for _ in range(enc_layers):
        enc_resting.append(gat_layer(d, hidden))
        d = hidden
    d = in_dim
    for _ in range(enc_layers):
        enc_rigid.append(gat_layer(d, hidden))
        d = hidden

    # MHA heads: per-head Linear(hidden, hidden) stacked along the lane dim.
    mha_ws, mha_bs = [], []
    for _ in range(n_heads):
        w, b = dense(hidden, hidden)
        mha_ws.append(w)
        mha_bs.append(b)
    mha_w = jnp.concatenate(mha_ws, axis=1)                  # [hidden, n_heads*hidden]
    mha_b = jnp.concatenate(mha_bs, axis=1)                  # [1, n_heads*hidden]

    dec_hidden = []
    d = hidden * (n_heads + 1)                               # use_mha=True branch
    for _ in range(dec_layers):
        dec_hidden.append(dense(d, hidden))
        d = hidden
    dec_out = dense(hidden, out_dim)

    return {"enc_resting": enc_resting, "enc_rigid": enc_rigid,
            "mha_w": mha_w, "mha_b": mha_b,
            "dec_hidden": dec_hidden, "dec_out": dec_out}


# ----------------------------------------------------------------------------
# Pack all parameters into one [rows, 128] f32 slab (single DMA)
# ----------------------------------------------------------------------------
def pack_params(params, hidden, n_heads, out_dim):
    assert n_heads * hidden <= LANES, "packed MHA weight must fit in 128 lanes"
    assert hidden + 1 <= LANES and out_dim <= LANES

    blocks, off = [], {}
    row = [0]

    def add(name, arr):
        r, c = arr.shape
        assert c <= LANES
        rp = ((r + 7) // 8) * 8                              # 8-sublane aligned blocks
        blk = jnp.zeros((rp, LANES), jnp.float32).at[:r, :c].set(arr)
        blocks.append(blk)
        off[name] = row[0]
        row[0] += rp

    for stack, layers in (("rest", params["enc_resting"]),
                          ("rig", params["enc_rigid"])):
        for l, (w, att_src, att_dst, bias) in enumerate(layers):
            w_aug = jnp.concatenate([w, w @ att_dst.T], axis=1)   # [in, H+1]
            add(f"enc_{stack}_{l}_w", w_aug)
            add(f"enc_{stack}_{l}_v", jnp.concatenate([att_src, bias], axis=0))

    add("mha_w", params["mha_w"])
    add("mha_b", params["mha_b"])
    for l, (w, b) in enumerate(params["dec_hidden"]):
        add(f"dec_{l}_w", w)
        add(f"dec_{l}_b", b)
    add("out_w", params["dec_out"][0])
    add("out_b", params["dec_out"][1])

    return jnp.concatenate(blocks, axis=0), off


# ----------------------------------------------------------------------------
# Graph helpers
# ----------------------------------------------------------------------------
def ring_edge_index(n):
    src = jnp.arange(n)
    dst = (src + 1) % n
    return jnp.concatenate([jnp.stack([src, dst]), jnp.stack([dst, src])], axis=1)


def dense_adj_mask(edge_index, n):
    """Additive mask: 0.0 where edge (incl. self loop), -1e30 elsewhere."""
    adj = jnp.zeros((n, n), jnp.float32)
    adj = adj.at[edge_index[1], edge_index[0]].set(1.0)      # adj[target, source]
    idx = jnp.arange(n)
    adj = adj.at[idx, idx].set(1.0)                          # add self loops
    return jnp.where(adj > 0.5, 0.0, NEG_INF).astype(jnp.float32)


if __name__ == "__main__":
    key = jax.random.PRNGKey(0)
    k_param, k_xr, k_xg, k_pos = jax.random.split(key, 4)

    # Small, shape-consistent config: input_dims=[4], hidden_dim=32,
    # output_dim=3, encoder_layers=2, decoder_layers=2, num_mha_heads=4.
    N_REST, N_RIGID = 16, 12
    IN_DIM, HIDDEN, OUT_DIM = 4, 32, 3
    ENC_LAYERS, DEC_LAYERS, N_HEADS = 2, 2, 4

    params = init_params(k_param, IN_DIM, HIDDEN, OUT_DIM,
                         ENC_LAYERS, DEC_LAYERS, N_HEADS)
    slab, off = pack_params(params, HIDDEN, N_HEADS, OUT_DIM)

    x_resting = jax.random.normal(k_xr, (N_REST, IN_DIM), jnp.float32)
    x_rigid = jax.random.normal(k_xg, (N_RIGID, IN_DIM), jnp.float32)
    pos_resting = jax.random.normal(k_pos, (N_REST, OUT_DIM), jnp.float32)

    mask_resting = dense_adj_mask(ring_edge_index(N_REST), N_REST)
    mask_rigid = dense_adj_mask(ring_edge_index(N_RIGID), N_RIGID)

    deformed_pos = graph_net_two_forward(
        slab, off, x_resting, mask_resting, x_rigid, mask_rigid, pos_resting,
        in_dim=IN_DIM, hidden=HIDDEN, n_heads=N_HEADS, out_dim=OUT_DIM,
        enc_layers=ENC_LAYERS, dec_layers=DEC_LAYERS)
    deformed_pos = jax.block_until_ready(deformed_pos)
    assert deformed_pos.shape == (N_REST, OUT_DIM)
    assert bool(jnp.all(jnp.isfinite(deformed_pos)))
    print("KERNEL_OK")
</pallas_src>

<mosaic_0001>
module attributes {stable_mosaic.version = 11 : i64} {
  func.func @fused_forward_kernel(%arg0: memref<16x4xf32, #tpu.memory_space<vmem>>, %arg1: memref<16x16xf32, #tpu.memory_space<vmem>>, %arg2: memref<12x4xf32, #tpu.memory_space<vmem>>, %arg3: memref<12x12xf32, #tpu.memory_space<vmem>>, %arg4: memref<16x3xf32, #tpu.memory_space<vmem>>, %arg5: memref<400x128xf32, #tpu.memory_space<vmem>>, %arg6: memref<16x3xf32, #tpu.memory_space<vmem>>) attributes {dimension_semantics = [], scalar_prefetch = 0 : i64, scratch_operands = 0 : i64, tpu.core_type = #tpu.core_type<tc>} {
    %c0 = arith.constant 0 : index
    %c0_0 = arith.constant 0 : index
    %0 = vector.load %arg0[%c0, %c0_0] : memref<16x4xf32, #tpu.memory_space<vmem>>, vector<16x4xf32>
    %c0_1 = arith.constant 0 : index
    %c0_2 = arith.constant 0 : index
    %1 = vector.load %arg1[%c0_1, %c0_2] : memref<16x16xf32, #tpu.memory_space<vmem>>, vector<16x16xf32>
    %c0_3 = arith.constant 0 : index
    %c0_4 = arith.constant 0 : index
    %2 = vector.load %arg5[%c0_3, %c0_4] : memref<400x128xf32, #tpu.memory_space<vmem>>, vector<4x128xf32>
    %cst = arith.constant dense<0.000000e+00> : vector<16x128xf32>
    %3 = tpu.matmul %0, %2, %cst {dimension_numbers = #tpu.dot_dimension_numbers<[1], [0], [0], [1], [0, 0, 1, 1], [], []>} : vector<16x4xf32>, vector<4x128xf32>, vector<16x128xf32> -> vector<16x128xf32>
    %4 = vector.extract_strided_slice %3 {offsets = [0, 0], sizes = [16, 32], strides = [1, 1]} : vector<16x128xf32> to vector<16x32xf32>
    %5 = vector.extract_strided_slice %3 {offsets = [0, 32], sizes = [16, 1], strides = [1, 1]} : vector<16x128xf32> to vector<16x1xf32>
    %c8 = arith.constant 8 : index
    %c0_5 = arith.constant 0 : index
    %6 = vector.load %arg5[%c8, %c0_5] : memref<400x128xf32, #tpu.memory_space<vmem>>, vector<1x32xf32>
    %c9 = arith.constant 9 : index
    %c0_6 = arith.constant 0 : index
    %7 = vector.load %arg5[%c9, %c0_6] : memref<400x128xf32, #tpu.memory_space<vmem>>, vector<1x32xf32>
    %cst_7 = arith.constant dense<0.000000e+00> : vector<1x16xf32>
    %8 = tpu.matmul %6, %4, %cst_7 {dimension_numbers = #tpu.dot_dimension_numbers<[1], [1], [0], [0], [0, 0, 1, 0], [], []>} : vector<1x32xf32>, vector<16x32xf32>, vector<1x16xf32> -> vector<1x16xf32>
    %9 = vector.broadcast %5 : vector<16x1xf32> to vector<16x16xf32>
    %10 = vector.broadcast %8 : vector<1x16xf32> to vector<16x16xf32>
    %11 = arith.addf %9, %10 : vector<16x16xf32>
    %cst_8 = arith.constant 0.000000e+00 : f32
    %12 = vector.broadcast %cst_8 : f32 to vector<16x16xf32>
    %13 = arith.cmpf ogt, %11, %12 : vector<16x16xf32>
    %cst_9 = arith.constant 2.000000e-01 : f32
    %14 = vector.broadcast %cst_9 : f32 to vector<16x16xf32>
    %15 = arith.mulf %14, %11 : vector<16x16xf32>
    %16 = arith.select %13, %11, %15 : vector<16x16xi1>, vector<16x16xf32>
    %17 = arith.addf %16, %1 : vector<16x16xf32>
    %cst_10 = arith.constant dense<0xFF800000> : vector<16xf32>
    %18 = vector.multi_reduction <maximumf>, %17, %cst_10 [1] : vector<16x16xf32> to vector<16xf32>
    %19 = vector.shape_cast %18 : vector<16xf32> to vector<16x1xf32>
    %20 = vector.broadcast %19 : vector<16x1xf32> to vector<16x16xf32>
    %21 = arith.subf %17, %20 : vector<16x16xf32>
    %22 = math.exp %21 : vector<16x16xf32>
    %cst_11 = arith.constant dense<0.000000e+00> : vector<16xf32>
    %23 = vector.multi_reduction <add>, %22, %cst_11 [1] : vector<16x16xf32> to vector<16xf32>
    %24 = vector.shape_cast %23 : vector<16xf32> to vector<16x1xf32>
    %25 = tpu.reciprocal %24 {approx = true} : vector<16x1xf32> -> vector<16x1xf32>
    %26 = vector.broadcast %25 : vector<16x1xf32> to vector<16x16xf32>
    %27 = arith.mulf %22, %26 : vector<16x16xf32>
    %cst_12 = arith.constant dense<0.000000e+00> : vector<16x32xf32>
    %28 = tpu.matmul %27, %4, %cst_12 {dimension_numbers = #tpu.dot_dimension_numbers<[1], [0], [0], [1], [0, 0, 1, 1], [], []>} : vector<16x16xf32>, vector<16x32xf32>, vector<16x32xf32> -> vector<16x32xf32>
    %29 = vector.broadcast %7 : vector<1x32xf32> to vector<16x32xf32>
    %30 = arith.addf %28, %29 : vector<16x32xf32>
    %cst_13 = arith.constant 0.000000e+00 : f32
    %31 = vector.broadcast %cst_13 : f32 to vector<16x32xf32>
    %32 = arith.maximumf %30, %31 : vector<16x32xf32>
    %c16 = arith.constant 16 : index
    %c0_14 = arith.constant 0 : index
    %33 = vector.load %arg5[%c16, %c0_14] : memref<400x128xf32, #tpu.memory_space<vmem>>, vector<32x128xf32>
    %cst_15 = arith.constant dense<0.000000e+00> : vector<16x128xf32>
    %34 = tpu.matmul %32, %33, %cst_15 {dimension_numbers = #tpu.dot_dimension_numbers<[1], [0], [0], [1], [0, 0, 1, 1], [], []>} : vector<16x32xf32>, vector<32x128xf32>, vector<16x128xf32> -> vector<16x128xf32>
    %35 = vector.extract_strided_slice %34 {offsets = [0, 0], sizes = [16, 32], strides = [1, 1]} : vector<16x128xf32> to vector<16x32xf32>
    %36 = vector.extract_strided_slice %34 {offsets = [0, 32], sizes = [16, 1], strides = [1, 1]} : vector<16x128xf32> to vector<16x1xf32>
    %c48 = arith.constant 48 : index
    %c0_16 = arith.constant 0 : index
    %37 = vector.load %arg5[%c48, %c0_16] : memref<400x128xf32, #tpu.memory_space<vmem>>, vector<1x32xf32>
    %c49 = arith.constant 49 : index
    %c0_17 = arith.constant 0 : index
    %38 = vector.load %arg5[%c49, %c0_17] : memref<400x128xf32, #tpu.memory_space<vmem>>, vector<1x32xf32>
    %cst_18 = arith.constant dense<0.000000e+00> : vector<1x16xf32>
    %39 = tpu.matmul %37, %35, %cst_18 {dimension_numbers = #tpu.dot_dimension_numbers<[1], [1], [0], [0], [0, 0, 1, 0], [], []>} : vector<1x32xf32>, vector<16x32xf32>, vector<1x16xf32> -> vector<1x16xf32>
    %40 = vector.broadcast %36 : vector<16x1xf32> to vector<16x16xf32>
    %41 = vector.broadcast %39 : vector<1x16xf32> to vector<16x16xf32>
    %42 = arith.addf %40, %41 : vector<16x16xf32>
    %cst_19 = arith.constant 0.000000e+00 : f32
    %43 = vector.broadcast %cst_19 : f32 to vector<16x16xf32>
    %44 = arith.cmpf ogt, %42, %43 : vector<16x16xf32>
    %cst_20 = arith.constant 2.000000e-01 : f32
    %45 = vector.broadcast %cst_20 : f32 to vector<16x16xf32>
    %46 = arith.mulf %45, %42 : vector<16x16xf32>
    %47 = arith.select %44, %42, %46 : vector<16x16xi1>, vector<16x16xf32>
    %48 = arith.addf %47, %1 : vector<16x16xf32>
    %cst_21 = arith.constant dense<0xFF800000> : vector<16xf32>
    %49 = vector.multi_reduction <maximumf>, %48, %cst_21 [1] : vector<16x16xf32> to vector<16xf32>
    %50 = vector.shape_cast %49 : vector<16xf32> to vector<16x1xf32>
    %51 = vector.broadcast %50 : vector<16x1xf32> to vector<16x16xf32>
    %52 = arith.subf %48, %51 : vector<16x16xf32>
    %53 = math.exp %52 : vector<16x16xf32>
    %cst_22 = arith.constant dense<0.000000e+00> : vector<16xf32>
    %54 = vector.multi_reduction <add>, %53, %cst_22 [1] : vector<16x16xf32> to vector<16xf32>
    %55 = vector.shape_cast %54 : vector<16xf32> to vector<16x1xf32>
    %56 = tpu.reciprocal %55 {approx = true} : vector<16x1xf32> -> vector<16x1xf32>
    %57 = vector.broadcast %56 : vector<16x1xf32> to vector<16x16xf32>
    %58 = arith.mulf %53, %57 : vector<16x16xf32>
    %cst_23 = arith.constant dense<0.000000e+00> : vector<16x32xf32>
    %59 = tpu.matmul %58, %35, %cst_23 {dimension_numbers = #tpu.dot_dimension_numbers<[1], [0], [0], [1], [0, 0, 1, 1], [], []>} : vector<16x16xf32>, vector<16x32xf32>, vector<16x32xf32> -> vector<16x32xf32>
    %60 = vector.broadcast %38 : vector<1x32xf32> to vector<16x32xf32>
    %61 = arith.addf %59, %60 : vector<16x32xf32>
    %cst_24 = arith.constant 0.000000e+00 : f32
    %62 = vector.broadcast %cst_24 : f32 to vector<16x32xf32>
    %63 = arith.maximumf %61, %62 : vector<16x32xf32>
    %c0_25 = arith.constant 0 : index
    %c0_26 = arith.constant 0 : index
    %64 = vector.load %arg2[%c0_25, %c0_26] : memref<12x4xf32, #tpu.memory_space<vmem>>, vector<12x4xf32>
    %c0_27 = arith.constant 0 : index
    %c0_28 = arith.constant 0 : index
    %65 = vector.load %arg3[%c0_27, %c0_28] : memref<12x12xf32, #tpu.memory_space<vmem>>, vector<12x12xf32>
    %c56 = arith.constant 56 : index
    %c0_29 = arith.constant 0 : index
    %66 = vector.load %arg5[%c56, %c0_29] : memref<400x128xf32, #tpu.memory_space<vmem>>, vector<4x128xf32>
    %cst_30 = arith.constant dense<0.000000e+00> : vector<12x128xf32>
    %67 = tpu.matmul %64, %66, %cst_30 {dimension_numbers = #tpu.dot_dimension_numbers<[1], [0], [0], [1], [0, 0, 1, 1], [], []>} : vector<12x4xf32>, vector<4x128xf32>, vector<12x128xf32> -> vector<12x128xf32>
    %68 = vector.extract_strided_slice %67 {offsets = [0, 0], sizes = [12, 32], strides = [1, 1]} : vector<12x128xf32> to vector<12x32xf32>
    %69 = vector.extract_strided_slice %67 {offsets = [0, 32], sizes = [12, 1], strides = [1, 1]} : vector<12x128xf32> to vector<12x1xf32>
    %c64 = arith.constant 64 : index
    %c0_31 = arith.constant 0 : index
    %70 = vector.load %arg5[%c64, %c0_31] : memref<400x128xf32, #tpu.memory_space<vmem>>, vector<1x32xf32>
    %c65 = arith.constant 65 : index
    %c0_32 = arith.constant 0 : index
    %71 = vector.load %arg5[%c65, %c0_32] : memref<400x128xf32, #tpu.memory_space<vmem>>, vector<1x32xf32>
    %cst_33 = arith.constant dense<0.000000e+00> : vector<1x12xf32>
    %72 = tpu.matmul %70, %68, %cst_33 {dimension_numbers = #tpu.dot_dimension_numbers<[1], [1], [0], [0], [0, 0, 1, 0], [], []>} : vector<1x32xf32>, vector<12x32xf32>, vector<1x12xf32> -> vector<1x12xf32>
    %73 = vector.broadcast %69 : vector<12x1xf32> to vector<12x12xf32>
    %74 = vector.broadcast %72 : vector<1x12xf32> to vector<12x12xf32>
    %75 = arith.addf %73, %74 : vector<12x12xf32>
    %cst_34 = arith.constant 0.000000e+00 : f32
    %76 = vector.broadcast %cst_34 : f32 to vector<12x12xf32>
    %77 = arith.cmpf ogt, %75, %76 : vector<12x12xf32>
    %cst_35 = arith.constant 2.000000e-01 : f32
    %78 = vector.broadcast %cst_35 : f32 to vector<12x12xf32>
    %79 = arith.mulf %78, %75 : vector<12x12xf32>
    %80 = arith.select %77, %75, %79 : vector<12x12xi1>, vector<12x12xf32>
    %81 = arith.addf %80, %65 : vector<12x12xf32>
    %cst_36 = arith.constant dense<0xFF800000> : vector<12xf32>
    %82 = vector.multi_reduction <maximumf>, %81, %cst_36 [1] : vector<12x12xf32> to vector<12xf32>
    %83 = vector.shape_cast %82 : vector<12xf32> to vector<12x1xf32>
    %84 = vector.broadcast %83 : vector<12x1xf32> to vector<12x12xf32>
    %85 = arith.subf %81, %84 : vector<12x12xf32>
    %86 = math.exp %85 : vector<12x12xf32>
    %cst_37 = arith.constant dense<0.000000e+00> : vector<12xf32>
    %87 = vector.multi_reduction <add>, %86, %cst_37 [1] : vector<12x12xf32> to vector<12xf32>
    %88 = vector.shape_cast %87 : vector<12xf32> to vector<12x1xf32>
    %89 = tpu.reciprocal %88 {approx = true} : vector<12x1xf32> -> vector<12x1xf32>
    %90 = vector.broadcast %89 : vector<12x1xf32> to vector<12x12xf32>
    %91 = arith.mulf %86, %90 : vector<12x12xf32>
    %cst_38 = arith.constant dense<0.000000e+00> : vector<12x32xf32>
    %92 = tpu.matmul %91, %68, %cst_38 {dimension_numbers = #tpu.dot_dimension_numbers<[1], [0], [0], [1], [0, 0, 1, 1], [], []>} : vector<12x12xf32>, vector<12x32xf32>, vector<12x32xf32> -> vector<12x32xf32>
    %93 = vector.broadcast %71 : vector<1x32xf32> to vector<12x32xf32>
    %94 = arith.addf %92, %93 : vector<12x32xf32>
    %cst_39 = arith.constant 0.000000e+00 : f32
    %95 = vector.broadcast %cst_39 : f32 to vector<12x32xf32>
    %96 = arith.maximumf %94, %95 : vector<12x32xf32>
    %c72 = arith.constant 72 : index
    %c0_40 = arith.constant 0 : index
    %97 = vector.load %arg5[%c72, %c0_40] : memref<400x128xf32, #tpu.memory_space<vmem>>, vector<32x128xf32>
    %cst_41 = arith.constant dense<0.000000e+00> : vector<12x128xf32>
    %98 = tpu.matmul %96, %97, %cst_41 {dimension_numbers = #tpu.dot_dimension_numbers<[1], [0], [0], [1], [0, 0, 1, 1], [], []>} : vector<12x32xf32>, vector<32x128xf32>, vector<12x128xf32> -> vector<12x128xf32>
    %99 = vector.extract_strided_slice %98 {offsets = [0, 0], sizes = [12, 32], strides = [1, 1]} : vector<12x128xf32> to vector<12x32xf32>
    %100 = vector.extract_strided_slice %98 {offsets = [0, 32], sizes = [12, 1], strides = [1, 1]} : vector<12x128xf32> to vector<12x1xf32>
    %c104 = arith.constant 104 : index
    %c0_42 = arith.constant 0 : index
    %101 = vector.load %arg5[%c104, %c0_42] : memref<400x128xf32, #tpu.memory_space<vmem>>, vector<1x32xf32>
    %c105 = arith.constant 105 : index
    %c0_43 = arith.constant 0 : index
    %102 = vector.load %arg5[%c105, %c0_43] : memref<400x128xf32, #tpu.memory_space<vmem>>, vector<1x32xf32>
    %cst_44 = arith.constant dense<0.000000e+00> : vector<1x12xf32>
    %103 = tpu.matmul %101, %99, %cst_44 {dimension_numbers = #tpu.dot_dimension_numbers<[1], [1], [0], [0], [0, 0, 1, 0], [], []>} : vector<1x32xf32>, vector<12x32xf32>, vector<1x12xf32> -> vector<1x12xf32>
    %104 = vector.broadcast %100 : vector<12x1xf32> to vector<12x12xf32>
    %105 = vector.broadcast %103 : vector<1x12xf32> to vector<12x12xf32>
    %106 = arith.addf %104, %105 : vector<12x12xf32>
    %cst_45 = arith.constant 0.000000e+00 : f32
    %107 = vector.broadcast %cst_45 : f32 to vector<12x12xf32>
    %108 = arith.cmpf ogt, %106, %107 : vector<12x12xf32>
    %cst_46 = arith.constant 2.000000e-01 : f32
    %109 = vector.broadcast %cst_46 : f32 to vector<12x12xf32>
    %110 = arith.mulf %109, %106 : vector<12x12xf32>
    %111 = arith.select %108, %106, %110 : vector<12x12xi1>, vector<12x12xf32>
    %112 = arith.addf %111, %65 : vector<12x12xf32>
    %cst_47 = arith.constant dense<0xFF800000> : vector<12xf32>
    %113 = vector.multi_reduction <maximumf>, %112, %cst_47 [1] : vector<12x12xf32> to vector<12xf32>
    %114 = vector.shape_cast %113 : vector<12xf32> to vector<12x1xf32>
    %115 = vector.broadcast %114 : vector<12x1xf32> to vector<12x12xf32>
    %116 = arith.subf %112, %115 : vector<12x12xf32>
    %117 = math.exp %116 : vector<12x12xf32>
    %cst_48 = arith.constant dense<0.000000e+00> : vector<12xf32>
    %118 = vector.multi_reduction <add>, %117, %cst_48 [1] : vector<12x12xf32> to vector<12xf32>
    %119 = vector.shape_cast %118 : vector<12xf32> to vector<12x1xf32>
    %120 = tpu.reciprocal %119 {approx = true} : vector<12x1xf32> -> vector<12x1xf32>
    %121 = vector.broadcast %120 : vector<12x1xf32> to vector<12x12xf32>
    %122 = arith.mulf %117, %121 : vector<12x12xf32>
    %cst_49 = arith.constant dense<0.000000e+00> : vector<12x32xf32>
    %123 = tpu.matmul %122, %99, %cst_49 {dimension_numbers = #tpu.dot_dimension_numbers<[1], [0], [0], [1], [0, 0, 1, 1], [], []>} : vector<12x12xf32>, vector<12x32xf32>, vector<12x32xf32> -> vector<12x32xf32>
    %124 = vector.broadcast %102 : vector<1x32xf32> to vector<12x32xf32>
    %125 = arith.addf %123, %124 : vector<12x32xf32>
    %cst_50 = arith.constant 0.000000e+00 : f32
    %126 = vector.broadcast %cst_50 : f32 to vector<12x32xf32>
    %127 = arith.maximumf %125, %126 : vector<12x32xf32>
    %c112 = arith.constant 112 : index
    %c0_51 = arith.constant 0 : index
    %128 = vector.load %arg5[%c112, %c0_51] : memref<400x128xf32, #tpu.memory_space<vmem>>, vector<32x128xf32>
    %c144 = arith.constant 144 : index
    %c0_52 = arith.constant 0 : index
    %129 = vector.load %arg5[%c144, %c0_52] : memref<400x128xf32, #tpu.memory_space<vmem>>, vector<1x128xf32>
    %130 = tpu.concatenate %63, %127 in 0 : vector<16x32xf32>, vector<12x32xf32> -> vector<28x32xf32>
    %cst_53 = arith.constant dense<0.000000e+00> : vector<28x128xf32>
    %131 = tpu.matmul %130, %128, %cst_53 {dimension_numbers = #tpu.dot_dimension_numbers<[1], [0], [0], [1], [0, 0, 1, 1], [], []>} : vector<28x32xf32>, vector<32x128xf32>, vector<28x128xf32> -> vector<28x128xf32>
    %132 = vector.broadcast %129 : vector<1x128xf32> to vector<28x128xf32>
    %133 = arith.addf %131, %132 : vector<28x128xf32>
    %134 = vector.extract_strided_slice %133 {offsets = [0, 0], sizes = [16, 128], strides = [1, 1]} : vector<28x128xf32> to vector<16x128xf32>
    %135 = vector.extract_strided_slice %133 {offsets = [16, 0], sizes = [12, 128], strides = [1, 1]} : vector<28x128xf32> to vector<12x128xf32>
    %136 = vector.extract_strided_slice %134 {offsets = [0, 0], sizes = [16, 32], strides = [1, 1]} : vector<16x128xf32> to vector<16x32xf32>
    %137 = vector.extract_strided_slice %135 {offsets = [0, 0], sizes = [12, 32], strides = [1, 1]} : vector<12x128xf32> to vector<12x32xf32>
    %cst_54 = arith.constant dense<0.000000e+00> : vector<16x12xf32>
    %138 = tpu.matmul %136, %137, %cst_54 {dimension_numbers = #tpu.dot_dimension_numbers<[1], [1], [0], [0], [0, 0, 1, 0], [], []>} : vector<16x32xf32>, vector<12x32xf32>, vector<16x12xf32> -> vector<16x12xf32>
    %cst_55 = arith.constant dense<0xFF800000> : vector<16xf32>
    %139 = vector.multi_reduction <maximumf>, %138, %cst_55 [1] : vector<16x12xf32> to vector<16xf32>
    %140 = vector.shape_cast %139 : vector<16xf32> to vector<16x1xf32>
    %141 = vector.broadcast %140 : vector<16x1xf32> to vector<16x12xf32>
    %142 = arith.subf %138, %141 : vector<16x12xf32>
    %143 = math.exp %142 : vector<16x12xf32>
    %cst_56 = arith.constant dense<0.000000e+00> : vector<16xf32>
    %144 = vector.multi_reduction <add>, %143, %cst_56 [1] : vector<16x12xf32> to vector<16xf32>
    %145 = vector.shape_cast %144 : vector<16xf32> to vector<16x1xf32>
    %146 = tpu.reciprocal %145 {approx = true} : vector<16x1xf32> -> vector<16x1xf32>
    %147 = vector.broadcast %146 : vector<16x1xf32> to vector<16x12xf32>
    %148 = arith.mulf %143, %147 : vector<16x12xf32>
    %cst_57 = arith.constant dense<0.000000e+00> : vector<16x32xf32>
    %149 = tpu.matmul %148, %127, %cst_57 {dimension_numbers = #tpu.dot_dimension_numbers<[1], [0], [0], [1], [0, 0, 1, 1], [], []>} : vector<16x12xf32>, vector<12x32xf32>, vector<16x32xf32> -> vector<16x32xf32>
    %150 = vector.extract_strided_slice %134 {offsets = [0, 32], sizes = [16, 32], strides = [1, 1]} : vector<16x128xf32> to vector<16x32xf32>
    %151 = vector.extract_strided_slice %135 {offsets = [0, 32], sizes = [12, 32], strides = [1, 1]} : vector<12x128xf32> to vector<12x32xf32>
    %cst_58 = arith.constant dense<0.000000e+00> : vector<16x12xf32>
    %152 = tpu.matmul %150, %151, %cst_58 {dimension_numbers = #tpu.dot_dimension_numbers<[1], [1], [0], [0], [0, 0, 1, 0], [], []>} : vector<16x32xf32>, vector<12x32xf32>, vector<16x12xf32> -> vector<16x12xf32>
    %cst_59 = arith.constant dense<0xFF800000> : vector<16xf32>
    %153 = vector.multi_reduction <maximumf>, %152, %cst_59 [1] : vector<16x12xf32> to vector<16xf32>
    %154 = vector.shape_cast %153 : vector<16xf32> to vector<16x1xf32>
    %155 = vector.broadcast %154 : vector<16x1xf32> to vector<16x12xf32>
    %156 = arith.subf %152, %155 : vector<16x12xf32>
    %157 = math.exp %156 : vector<16x12xf32>
    %cst_60 = arith.constant dense<0.000000e+00> : vector<16xf32>
    %158 = vector.multi_reduction <add>, %157, %cst_60 [1] : vector<16x12xf32> to vector<16xf32>
    %159 = vector.shape_cast %158 : vector<16xf32> to vector<16x1xf32>
    %160 = tpu.reciprocal %159 {approx = true} : vector<16x1xf32> -> vector<16x1xf32>
    %161 = vector.broadcast %160 : vector<16x1xf32> to vector<16x12xf32>
    %162 = arith.mulf %157, %161 : vector<16x12xf32>
    %cst_61 = arith.constant dense<0.000000e+00> : vector<16x32xf32>
    %163 = tpu.matmul %162, %127, %cst_61 {dimension_numbers = #tpu.dot_dimension_numbers<[1], [0], [0], [1], [0, 0, 1, 1], [], []>} : vector<16x12xf32>, vector<12x32xf32>, vector<16x32xf32> -> vector<16x32xf32>
    %164 = vector.extract_strided_slice %134 {offsets = [0, 64], sizes = [16, 32], strides = [1, 1]} : vector<16x128xf32> to vector<16x32xf32>
    %165 = vector.extract_strided_slice %135 {offsets = [0, 64], sizes = [12, 32], strides = [1, 1]} : vector<12x128xf32> to vector<12x32xf32>
    %cst_62 = arith.constant dense<0.000000e+00> : vector<16x12xf32>
    %166 = tpu.matmul %164, %165, %cst_62 {dimension_numbers = #tpu.dot_dimension_numbers<[1], [1], [0], [0], [0, 0, 1, 0], [], []>} : vector<16x32xf32>, vector<12x32xf32>, vector<16x12xf32> -> vector<16x12xf32>
    %cst_63 = arith.constant dense<0xFF800000> : vector<16xf32>
    %167 = vector.multi_reduction <maximumf>, %166, %cst_63 [1] : vector<16x12xf32> to vector<16xf32>
    %168 = vector.shape_cast %167 : vector<16xf32> to vector<16x1xf32>
    %169 = vector.broadcast %168 : vector<16x1xf32> to vector<16x12xf32>
    %170 = arith.subf %166, %169 : vector<16x12xf32>
    %171 = math.exp %170 : vector<16x12xf32>
    %cst_64 = arith.constant dense<0.000000e+00> : vector<16xf32>
    %172 = vector.multi_reduction <add>, %171, %cst_64 [1] : vector<16x12xf32> to vector<16xf32>
    %173 = vector.shape_cast %172 : vector<16xf32> to vector<16x1xf32>
    %174 = tpu.reciprocal %173 {approx = true} : vector<16x1xf32> -> vector<16x1xf32>
    %175 = vector.broadcast %174 : vector<16x1xf32> to vector<16x12xf32>
    %176 = arith.mulf %171, %175 : vector<16x12xf32>
    %cst_65 = arith.constant dense<0.000000e+00> : vector<16x32xf32>
    %177 = tpu.matmul %176, %127, %cst_65 {dimension_numbers = #tpu.dot_dimension_numbers<[1], [0], [0], [1], [0, 0, 1, 1], [], []>} : vector<16x12xf32>, vector<12x32xf32>, vector<16x32xf32> -> vector<16x32xf32>
    %178 = vector.extract_strided_slice %134 {offsets = [0, 96], sizes = [16, 32], strides = [1, 1]} : vector<16x128xf32> to vector<16x32xf32>
    %179 = vector.extract_strided_slice %135 {offsets = [0, 96], sizes = [12, 32], strides = [1, 1]} : vector<12x128xf32> to vector<12x32xf32>
    %cst_66 = arith.constant dense<0.000000e+00> : vector<16x12xf32>
    %180 = tpu.matmul %178, %179, %cst_66 {dimension_numbers = #tpu.dot_dimension_numbers<[1], [1], [0], [0], [0, 0, 1, 0], [], []>} : vector<16x32xf32>, vector<12x32xf32>, vector<16x12xf32> -> vector<16x12xf32>
    %cst_67 = arith.constant dense<0xFF800000> : vector<16xf32>
    %181 = vector.multi_reduction <maximumf>, %180, %cst_67 [1] : vector<16x12xf32> to vector<16xf32>
    %182 = vector.shape_cast %181 : vector<16xf32> to vector<16x1xf32>
    %183 = vector.broadcast %182 : vector<16x1xf32> to vector<16x12xf32>
    %184 = arith.subf %180, %183 : vector<16x12xf32>
    %185 = math.exp %184 : vector<16x12xf32>
    %cst_68 = arith.constant dense<0.000000e+00> : vector<16xf32>
    %186 = vector.multi_reduction <add>, %185, %cst_68 [1] : vector<16x12xf32> to vector<16xf32>
    %187 = vector.shape_cast %186 : vector<16xf32> to vector<16x1xf32>
    %188 = tpu.reciprocal %187 {approx = true} : vector<16x1xf32> -> vector<16x1xf32>
    %189 = vector.broadcast %188 : vector<16x1xf32> to vector<16x12xf32>
    %190 = arith.mulf %185, %189 : vector<16x12xf32>
    %cst_69 = arith.constant dense<0.000000e+00> : vector<16x32xf32>
    %191 = tpu.matmul %190, %127, %cst_69 {dimension_numbers = #tpu.dot_dimension_numbers<[1], [0], [0], [1], [0, 0, 1, 1], [], []>} : vector<16x12xf32>, vector<12x32xf32>, vector<16x32xf32> -> vector<16x32xf32>
    %192 = tpu.concatenate %149, %163, %177, %191 in 1 : vector<16x32xf32>, vector<16x32xf32>, vector<16x32xf32>, vector<16x32xf32> -> vector<16x128xf32>
    %c152 = arith.constant 152 : index
    %c0_70 = arith.constant 0 : index
    %193 = vector.load %arg5[%c152, %c0_70] : memref<400x128xf32, #tpu.memory_space<vmem>>, vector<32x32xf32>
    %cst_71 = arith.constant dense<0.000000e+00> : vector<16x32xf32>
    %194 = tpu.matmul %63, %193, %cst_71 {dimension_numbers = #tpu.dot_dimension_numbers<[1], [0], [0], [1], [0, 0, 1, 1], [], []>} : vector<16x32xf32>, vector<32x32xf32>, vector<16x32xf32> -> vector<16x32xf32>
    %c184 = arith.constant 184 : index
    %c0_72 = arith.constant 0 : index
    %195 = vector.load %arg5[%c184, %c0_72] : memref<400x128xf32, #tpu.memory_space<vmem>>, vector<128x32xf32>
    %cst_73 = arith.constant dense<0.000000e+00> : vector<16x32xf32>
    %196 = tpu.matmul %192, %195, %cst_73 {dimension_numbers = #tpu.dot_dimension_numbers<[1], [0], [0], [1], [0, 0, 1, 1], [], []>} : vector<16x128xf32>, vector<128x32xf32>, vector<16x32xf32> -> vector<16x32xf32>
    %197 = arith.addf %194, %196 : vector<16x32xf32>
    %c312 = arith.constant 312 : index
    %c0_74 = arith.constant 0 : index
    %198 = vector.load %arg5[%c312, %c0_74] : memref<400x128xf32, #tpu.memory_space<vmem>>, vector<1x32xf32>
    %199 = vector.broadcast %198 : vector<1x32xf32> to vector<16x32xf32>
    %200 = arith.addf %197, %199 : vector<16x32xf32>
    %cst_75 = arith.constant 0.000000e+00 : f32
    %201 = vector.broadcast %cst_75 : f32 to vector<16x32xf32>
    %202 = arith.maximumf %200, %201 : vector<16x32xf32>
    %c320 = arith.constant 320 : index
    %c0_76 = arith.constant 0 : index
    %203 = vector.load %arg5[%c320, %c0_76] : memref<400x128xf32, #tpu.memory_space<vmem>>, vector<32x32xf32>
    %cst_77 = arith.constant dense<0.000000e+00> : vector<16x32xf32>
    %204 = tpu.matmul %202, %203, %cst_77 {dimension_numbers = #tpu.dot_dimension_numbers<[1], [0], [0], [1], [0, 0, 1, 1], [], []>} : vector<16x32xf32>, vector<32x32xf32>, vector<16x32xf32> -> vector<16x32xf32>
    %c352 = arith.constant 352 : index
    %c0_78 = arith.constant 0 : index
    %205 = vector.load %arg5[%c352, %c0_78] : memref<400x128xf32, #tpu.memory_space<vmem>>, vector<1x32xf32>
    %206 = vector.broadcast %205 : vector<1x32xf32> to vector<16x32xf32>
    %207 = arith.addf %204, %206 : vector<16x32xf32>
    %cst_79 = arith.constant 0.000000e+00 : f32
    %208 = vector.broadcast %cst_79 : f32 to vector<16x32xf32>
    %209 = arith.maximumf %207, %208 : vector<16x32xf32>
    %c360 = arith.constant 360 : index
    %c0_80 = arith.constant 0 : index
    %210 = vector.load %arg5[%c360, %c0_80] : memref<400x128xf32, #tpu.memory_space<vmem>>, vector<32x128xf32>
    %cst_81 = arith.constant dense<0.000000e+00> : vector<16x128xf32>
    %211 = tpu.matmul %209, %210, %cst_81 {dimension_numbers = #tpu.dot_dimension_numbers<[1], [0], [0], [1], [0, 0, 1, 1], [], []>} : vector<16x32xf32>, vector<32x128xf32>, vector<16x128xf32> -> vector<16x128xf32>
    %212 = vector.extract_strided_slice %211 {offsets = [0, 0], sizes = [16, 3], strides = [1, 1]} : vector<16x128xf32> to vector<16x3xf32>
    %c392 = arith.constant 392 : index
    %c0_82 = arith.constant 0 : index
    %213 = vector.load %arg5[%c392, %c0_82] : memref<400x128xf32, #tpu.memory_space<vmem>>, vector<1x3xf32>
    %214 = vector.broadcast %213 : vector<1x3xf32> to vector<16x3xf32>
    %215 = arith.addf %212, %214 : vector<16x3xf32>
    %c0_83 = arith.constant 0 : index
    %c0_84 = arith.constant 0 : index
    %216 = vector.load %arg4[%c0_83, %c0_84] : memref<16x3xf32, #tpu.memory_space<vmem>>, vector<16x3xf32>
    %217 = arith.addf %216, %215 : vector<16x3xf32>
    %c0_85 = arith.constant 0 : index
    %c0_86 = arith.constant 0 : index
    %218 = vector.load %arg6[%c0_85, %c0_86] : memref<16x3xf32, #tpu.memory_space<vmem>>, vector<16x3xf32>
    tpu.vector_store %arg6[%c0_85, %c0_86], %217 {strides = array<i32>} : memref<16x3xf32, #tpu.memory_space<vmem>>, vector<16x3xf32>,
    return
  }
}

</mosaic_0001>

<llo_original>
// kernel: tpu_custom_call.1
$region0: #{tpu_custom_call.1}
  #allocation0 [shape = 'u32[]', space=smem, size = 0x4, offset = 0x4, fixed_abs, tag = 'smem constant byte address 0x4 - core index']
  #allocation1 [shape = 'u32[72,128]{1,0:T(1,128)}', space=vmem, size = 0x9000, scoped, tag = 'internal scratch']
  %s0 = inlined_call_operand.vmem [shape: f32[16,4], index: 0, kind: input, shape index: {}]
  %s1 = inlined_call_operand.vmem [shape: f32[16,16], index: 1, kind: input, shape index: {}]
  %s2 = inlined_call_operand.vmem [shape: f32[12,4], index: 2, kind: input, shape index: {}]
  %s3 = inlined_call_operand.vmem [shape: f32[12,12], index: 3, kind: input, shape index: {}]
  %s4 = inlined_call_operand.vmem [shape: f32[16,3], index: 4, kind: input, shape index: {}]
  %s5 = inlined_call_operand.hbm [shape: f32[400,128], index: 5, kind: input, shape index: {}]
  %s6 = inlined_call_operand.vmem [shape: f32[16,3], index: 6, kind: output, shape index: {}]
  %s7 = sld [smem:[#allocation0]]
  $region38: #{tpu_custom_call.1} parent=0
    _
  %s9 = ssub.s32 1, %s7
  %s10 = scalar_select 0, %s9, %s7
  $region1: #{tpu_custom_call.1} parent=0
    #allocation2 [shape = 'u8[204800]{0}', space=vmem, size = 0x32000, scoped, tag = 'input window, operand 5, single buffered']
    #allocation3 [shape = 's32[1]{0}', space=sflag, size = 0x4, scoped, tag = 'scoped memory for tpu_custom_call.1']
    %11 = vsyncpa [#allocation3], 0
    // Predicated region
    $region2: #{tpu_custom_call.1} parent=1 // pred_check
      _
    $region3: #{tpu_custom_call.1} parent=1 // pred_check_branch
      %13 = sbr.rel (0) target = $region5
    $region4: #{tpu_custom_call.1} parent=1 // pred_region
      _
    $region5: #{tpu_custom_call.1} parent=1 // pred_fallthru
      _
    // Predicated region
    $region6: #{tpu_custom_call.1} parent=1 // pred_check
      _
    $region7: #{tpu_custom_call.1} parent=1 // pred_check_branch
      %15 = sbr.rel (0) target = $region9
    $region8: #{tpu_custom_call.1} parent=1 // pred_region
      _
    $region9: #{tpu_custom_call.1} parent=1 // pred_fallthru
      _
    // Predicated region
    $region10: #{tpu_custom_call.1} parent=1 // pred_check
      _
    $region11: #{tpu_custom_call.1} parent=1 // pred_check_branch
      %17 = sbr.rel (0) target = $region13
    $region12: #{tpu_custom_call.1} parent=1 // pred_region
      _
    $region13: #{tpu_custom_call.1} parent=1 // pred_fallthru
      _
    // Predicated region
    $region14: #{tpu_custom_call.1} parent=1 // pred_check
      _
    $region15: #{tpu_custom_call.1} parent=1 // pred_check_branch
      %19 = sbr.rel (0) target = $region17
    $region16: #{tpu_custom_call.1} parent=1 // pred_region
      _
    $region17: #{tpu_custom_call.1} parent=1 // pred_fallthru
      _
    // Predicated region
    $region18: #{tpu_custom_call.1} parent=1 // pred_check
      _
    $region19: #{tpu_custom_call.1} parent=1 // pred_check_branch
      %21 = sbr.rel (0) target = $region21
    $region20: #{tpu_custom_call.1} parent=1 // pred_region
      _
    $region21: #{tpu_custom_call.1} parent=1 // pred_fallthru
      _
    // Predicated region
    $region22: #{tpu_custom_call.1} parent=1 // pred_check
      _
    $region23: #{tpu_custom_call.1} parent=1 // pred_check_branch
      %23 = sbr.rel (0) target = $region25
    $region24: #{tpu_custom_call.1} parent=1 // pred_region
      %25 = vsyncadd [#allocation3], 0
      %s26 = sshll.u32 %s5, 4
      %s27 = int_to_ptr.hbm [resolvable:$true] %s26
      %s28 = sshll.u32 [#allocation2], 4
      %s29 = int_to_ptr.vmem [resolvable:$true] %s28
      %34 = dma.hbm_to_vmem [thread:$0]  %s27, 6400, %s29, [#allocation3], 128, 128, 8
    $region25: #{tpu_custom_call.1} parent=1 // pred_fallthru
      _
    // Predicated region
    $region26: #{tpu_custom_call.1} parent=1 // pred_check
      _
    $region27: #{tpu_custom_call.1} parent=1 // pred_check_branch
      %36 = sbr.rel (0) target = $region29
    $region28: #{tpu_custom_call.1} parent=1 // pred_region
      %38 = dma.done [#allocation3], 6400
    $region29: #{tpu_custom_call.1} parent=1 // pred_fallthru
      _
    %v39 = vld [vmem:[%s0] sm:$0xff]
    %v40 = vld [vmem:[%s0 + $0x8] sm:$0xff]
    %v41 = vld [vmem:[%s1] sm:$0xff]
    %v42 = vld [vmem:[%s1 + $0x8] sm:$0xff]
    %v43 = vld [vmem:[#allocation2] sm:$0xf]
    %vm44 = vcmask 31744
    %v46 = vsel %vm44, %v39, 0
    %v49 = vsel %vm44, %v40, 0
    %vm51 = vcmask 1043456
    %v53 = vsel %vm51, %v43, 0
    %55 = vmatpush.msra.mxu0 0.0
    %56 = vmatpush.msra.mxu0 0.0
    %57 = vmatpush.msra.mxu0 0.0
    %58 = vmatpush.msra.mxu0 0.0
    %59 = vmatpush.msra.mxu0 0.0
    %60 = vmatpush.msra.mxu0 0.0
    %61 = vmatpush.msra.mxu0 0.0
    %62 = vmatpush.msra.mxu0 0.0
    %63 = vmatpush.msra.mxu0 0.0
    %64 = vmatpush.msra.mxu0 0.0
    %65 = vmatpush.msra.mxu0 0.0
    %66 = vmatpush.msra.mxu0 0.0
    %67 = vmatpush.msra.mxu0 0.0
    %68 = vmatpush.msra.mxu0 0.0
    %69 = vmatpush.msra.mxu0 0.0
    %70 = vmatpush.msra.mxu0 %v53
    %71 = vmatmul.f32.gmra.mxu0 %v46
    %v72 = vpop.f32.mrf.mxu0
    %v73 = vadd.f32 0.0, %v72
    %74 = vmatmul.f32.gmra.mxu0 %v49
    %v75 = vpop.f32.mrf.mxu0
    %v76 = vadd.f32 0.0, %v75
    %77 = vdwg.mxu0
    %v78 = vld [vmem:[#allocation2 + $0x8] sm:$0x1]
    %v79 = vld [vmem:[#allocation2 + $0x9] sm:$0x1]
    %vm80 = vcmask 261120
    %v82 = vsel %vm80, %v78, 0
    %v85 = vsel %vm80, %v73, 0
    %v88 = vsel %vm80, %v76, 0
    %90 = vmatpush.xpose.msra.mxu0 0.0
    %91 = vmatpush.xpose.msra.mxu0 0.0
    %92 = vmatpush.xpose.msra.mxu0 0.0
    %93 = vmatpush.xpose.msra.mxu0 0.0
    %94 = vmatpush.xpose.msra.mxu0 0.0
    %95 = vmatpush.xpose.msra.mxu0 0.0
    %96 = vmatpush.xpose.msra.mxu0 0.0
    %97 = vmatpush.xpose.msra.mxu0 0.0
    %98 = vmatpush.xpose.msra.mxu0 0.0
    %99 = vmatpush.xpose.msra.mxu0 0.0
    %100 = vmatpush.xpose.msra.mxu0 0.0
    %101 = vmatpush.xpose.msra.mxu0 0.0
    %102 = vmatpush.xpose.msra.mxu0 0.0
    %103 = vmatpush.xpose.msra.mxu0 0.0
    %104 = vmatpush.xpose.msra.mxu0 %v88
    %105 = vmatpush.xpose.msra.mxu0 %v85
    %106 = vmatmul.f32.gmra.mxu0 %v82
    %v107 = vpop.f32.mrf.mxu0
    %v108 = vadd.f32 0.0, %v107
    %109 = vdwg.mxu0
    %110 = vset.pattern.permute.xlu0 32
    %111 = vperm.xlu0 %110, %v73
    %v112 = vpop.permute.xlu0 %111
    %114 = vset.pattern.permute.xlu0 32
    %115 = vperm.xlu0 %114, %v76
    %v116 = vpop.permute.xlu0 %115
    %v118 = vperm.slane %v108, 0
    %v119 = vadd.f32 %v112, %v118
    %v120 = vadd.f32 %v116, %v118
    %vm121 = vcmp.gt.f32.partialorder %v119, 0.0
    %vm122 = vcmp.gt.f32.partialorder %v120, 0.0
    %v123 = vmul.f32 %v119, 0.2
    %v124 = vmul.f32 %v120, 0.2
    %v125 = vsel %vm121, %v119, %v123
    %v126 = vsel %vm122, %v120, %v124
    %v127 = vadd.f32 %v125, %v41
    %v128 = vadd.f32 %v126, %v42
    %vm129 = vcmask 130048
    %v130 = vsel %vm129, %v127, -inf
    %131 = vmax.xlane.f32.xlu0 %v130
    %v132 = vpop.xlane.xlu0 %131
    %v133 = vsel %vm129, %v128, -inf
    %134 = vmax.xlane.f32.xlu0 %v133
    %v135 = vpop.xlane.xlu0 %134
    %v136 = vsub.f32 %v127, %v132
    %v137 = vsub.f32 %v128, %v135
    %v138 = vmul.f32 %v136, 1.442695
    %v139 = vpow.pop %v138
    %v140 = vmul.f32 %v137, 1.442695
    %v141 = vpow.pop %v140
    %v142 = vsel %vm129, %v139, 0.0
    %143 = vadd.xlane.f32.xlu0 %v142
    %v144 = vpop.xlane.xlu0 %143
    %v145 = vsel %vm129, %v141, 0.0
    %146 = vadd.xlane.f32.xlu0 %v145
    %v147 = vpop.xlane.xlu0 %146
    %v148 = vrcp.pop %v144
    %v149 = vrcp.pop %v147
    %v150 = vmul.f32 %v139, %v148
    %v151 = vmul.f32 %v141, %v149
    %v152 = vperm.slane %v79, 0
    %v154 = vsel %vm129, %v150, 0
    %v157 = vsel %vm129, %v151, 0
    %159 = vmatpush.msra.mxu0 0.0
    %160 = vmatpush.msra.mxu0 0.0
    %161 = vmatpush.msra.mxu0 0.0
    %162 = vmatpush.msra.mxu0 0.0
    %163 = vmatpush.msra.mxu0 0.0
    %164 = vmatpush.msra.mxu0 0.0
    %165 = vmatpush.msra.mxu0 0.0
    %166 = vmatpush.msra.mxu0 0.0
    %167 = vmatpush.msra.mxu0 0.0
    %168 = vmatpush.msra.mxu0 0.0
    %169 = vmatpush.msra.mxu0 0.0
    %170 = vmatpush.msra.mxu0 0.0
    %171 = vmatpush.msra.mxu0 0.0
    %172 = vmatpush.msra.mxu0 0.0
    %173 = vmatpush.msra.mxu0 %v76
    %174 = vmatpush.msra.mxu0 %v73
    %175 = vmatmul.f32.gmra.mxu0 %v154
    %v176 = vpop.f32.mrf.mxu0
    %v177 = vadd.f32 %v152, %v176
    %178 = vmatmul.f32.gmra.mxu0 %v157
    %v179 = vpop.f32.mrf.mxu0
    %v180 = vadd.f32 %v152, %v179
    %181 = vdwg.mxu0
    %v182 = vmax.f32 %v177, 0.0
    %v183 = vmax.f32 %v180, 0.0
    %v184 = vld [vmem:[#allocation2 + $0x10] sm:$0xff]
    %v185 = vld [vmem:[#allocation2 + $0x18] sm:$0xff]
    %v186 = vld [vmem:[#allocation2 + $0x20] sm:$0xff]
    %v187 = vld [vmem:[#allocation2 + $0x28] sm:$0xff]
    %v189 = vsel %vm80, %v182, 0
    %v192 = vsel %vm80, %v183, 0
    %194 = vmatpush.msra.mxu0 0.0
    %195 = vmatpush.msra.mxu0 0.0
    %196 = vmatpush.msra.mxu0 0.0
    %197 = vmatpush.msra.mxu0 0.0
    %198 = vmatpush.msra.mxu0 0.0
    %199 = vmatpush.msra.mxu0 0.0
    %200 = vmatpush.msra.mxu0 0.0
    %201 = vmatpush.msra.mxu0 0.0
    %202 = vmatpush.msra.mxu0 0.0
    %203 = vmatpush.msra.mxu0 0.0
    %204 = vmatpush.msra.mxu0 0.0
    %205 = vmatpush.msra.mxu0 0.0
    %206 = vmatpush.msra.mxu0 %v187
    %207 = vmatpush.msra.mxu0 %v186
    %208 = vmatpush.msra.mxu0 %v185
    %209 = vmatpush.msra.mxu0 %v184
    %210 = vmatmul.f32.gmra.mxu0 %v189
    %v211 = vpop.f32.mrf.mxu0
    %v212 = vadd.f32 0.0, %v211
    %213 = vmatmul.f32.gmra.mxu0 %v192
    %v214 = vpop.f32.mrf.mxu0
    %v215 = vadd.f32 0.0, %v214
    %216 = vdwg.mxu0
    %v217 = vld [vmem:[#allocation2 + $0x30] sm:$0x1]
    %v218 = vld [vmem:[#allocation2 + $0x31] sm:$0x1]
    %v220 = vsel %vm80, %v217, 0
    %v223 = vsel %vm80, %v212, 0
    %v226 = vsel %vm80, %v215, 0
    %228 = vmatpush.xpose.msra.mxu0 0.0
    %229 = vmatpush.xpose.msra.mxu0 0.0
    %230 = vmatpush.xpose.msra.mxu0 0.0
    %231 = vmatpush.xpose.msra.mxu0 0.0
    %232 = vmatpush.xpose.msra.mxu0 0.0
    %233 = vmatpush.xpose.msra.mxu0 0.0
    %234 = vmatpush.xpose.msra.mxu0 0.0
    %235 = vmatpush.xpose.msra.mxu0 0.0
    %236 = vmatpush.xpose.msra.mxu0 0.0
    %237 = vmatpush.xpose.msra.mxu0 0.0
    %238 = vmatpush.xpose.msra.mxu0 0.0
    %239 = vmatpush.xpose.msra.mxu0 0.0
    %240 = vmatpush.xpose.msra.mxu0 0.0
    %241 = vmatpush.xpose.msra.mxu0 0.0
    %242 = vmatpush.xpose.msra.mxu0 %v226
    %243 = vmatpush.xpose.msra.mxu0 %v223
    %244 = vmatmul.f32.gmra.mxu0 %v220
    %v245 = vpop.f32.mrf.mxu0
    %v246 = vadd.f32 0.0, %v245
    %247 = vdwg.mxu0
    %248 = vset.pattern.permute.xlu0 32
    %249 = vperm.xlu0 %248, %v212
    %v250 = vpop.permute.xlu0 %249
    %252 = vset.pattern.permute.xlu0 32
    %253 = vperm.xlu0 %252, %v215
    %v254 = vpop.permute.xlu0 %253
    %v256 = vperm.slane %v246, 0
    %v257 = vadd.f32 %v250, %v256
    %v258 = vadd.f32 %v254, %v256
    %vm259 = vcmp.gt.f32.partialorder %v257, 0.0
    %vm260 = vcmp.gt.f32.partialorder %v258, 0.0
    %v261 = vmul.f32 %v257, 0.2
    %v262 = vmul.f32 %v258, 0.2
    %v263 = vsel %vm259, %v257, %v261
    %v264 = vsel %vm260, %v258, %v262
    %v265 = vadd.f32 %v263, %v41
    %v266 = vadd.f32 %v264, %v42
    %v267 = vsel %vm129, %v265, -inf
    %268 = vmax.xlane.f32.xlu0 %v267
    %v269 = vpop.xlane.xlu0 %268
    %v270 = vsel %vm129, %v266, -inf
    %271 = vmax.xlane.f32.xlu0 %v270
    %v272 = vpop.xlane.xlu0 %271
    %v273 = vsub.f32 %v265, %v269
    %v274 = vsub.f32 %v266, %v272
    %v275 = vmul.f32 %v273, 1.442695
    %v276 = vpow.pop %v275
    %v277 = vmul.f32 %v274, 1.442695
    %v278 = vpow.pop %v277
    %v279 = vsel %vm129, %v276, 0.0
    %280 = vadd.xlane.f32.xlu0 %v279
    %v281 = vpop.xlane.xlu0 %280
    %v282 = vsel %vm129, %v278, 0.0
    %283 = vadd.xlane.f32.xlu0 %v282
    %v284 = vpop.xlane.xlu0 %283
    %v285 = vrcp.pop %v281
    %v286 = vrcp.pop %v284
    %v287 = vmul.f32 %v276, %v285
    %v288 = vmul.f32 %v278, %v286
    %v289 = vperm.slane %v218, 0
    %v291 = vsel %vm129, %v287, 0
    %v294 = vsel %vm129, %v288, 0
    %296 = vmatpush.msra.mxu0 0.0
    %297 = vmatpush.msra.mxu0 0.0
    %298 = vmatpush.msra.mxu0 0.0
    %299 = vmatpush.msra.mxu0 0.0
    %300 = vmatpush.msra.mxu0 0.0
    %301 = vmatpush.msra.mxu0 0.0
    %302 = vmatpush.msra.mxu0 0.0
    %303 = vmatpush.msra.mxu0 0.0
    %304 = vmatpush.msra.mxu0 0.0
    %305 = vmatpush.msra.mxu0 0.0
    %306 = vmatpush.msra.mxu0 0.0
    %307 = vmatpush.msra.mxu0 0.0
    %308 = vmatpush.msra.mxu0 0.0
    %309 = vmatpush.msra.mxu0 0.0
    %310 = vmatpush.msra.mxu0 %v215
    %311 = vmatpush.msra.mxu0 %v212
    %312 = vmatmul.f32.gmra.mxu0 %v291
    %v313 = vpop.f32.mrf.mxu0
    %v314 = vadd.f32 %v289, %v313
    %315 = vmatmul.f32.gmra.mxu0 %v294
    %v316 = vpop.f32.mrf.mxu0
    %v317 = vadd.f32 %v289, %v316
    %318 = vdwg.mxu0
    %v319 = vmax.f32 %v314, 0.0
    %v320 = vmax.f32 %v317, 0.0
    %v321 = vld [vmem:[%s2] sm:$0xff]
    %v322 = vld [vmem:[%s2 + $0x8] sm:$0xf]
    %v323 = vld [vmem:[%s3] sm:$0xff]
    %v324 = vld [vmem:[%s3 + $0x8] sm:$0xf]
    %v325 = vld [vmem:[#allocation2 + $0x38] sm:$0xf]
    %v327 = vsel %vm44, %v321, 0
    %v330 = vsel %vm44, %v322, 0
    %v333 = vsel %vm51, %v325, 0
    %335 = vmatpush.msra.mxu0 0.0
    %336 = vmatpush.msra.mxu0 0.0
    %337 = vmatpush.msra.mxu0 0.0
    %338 = vmatpush.msra.mxu0 0.0
    %339 = vmatpush.msra.mxu0 0.0
    %340 = vmatpush.msra.mxu0 0.0
    %341 = vmatpush.msra.mxu0 0.0
    %342 = vmatpush.msra.mxu0 0.0
    %343 = vmatpush.msra.mxu0 0.0
    %344 = vmatpush.msra.mxu0 0.0
    %345 = vmatpush.msra.mxu0 0.0
    %346 = vmatpush.msra.mxu0 0.0
    %347 = vmatpush.msra.mxu0 0.0
    %348 = vmatpush.msra.mxu0 0.0
    %349 = vmatpush.msra.mxu0 0.0
    %350 = vmatpush.msra.mxu0 %v333
    %351 = vmatmul.f32.gmra.mxu0 %v327
    %v352 = vpop.f32.mrf.mxu0
    %v353 = vadd.f32 0.0, %v352
    %354 = vmatmul.f32.gmra.mxu0 %v330
    %v355 = vpop.f32.mrf.mxu0
    %v356 = vadd.f32 0.0, %v355
    %357 = vdwg.mxu0
    %v358 = vld [vmem:[#allocation2 + $0x40] sm:$0x1]
    %v359 = vld [vmem:[#allocation2 + $0x41] sm:$0x1]
    %v361 = vsel %vm80, %v358, 0
    %v364 = vsel %vm80, %v353, 0
    %v367 = vsel %vm80, %v356, 0
    %369 = vmatpush.xpose.msra.mxu0 0.0
    %370 = vmatpush.xpose.msra.mxu0 0.0
    %371 = vmatpush.xpose.msra.mxu0 0.0
    %372 = vmatpush.xpose.msra.mxu0 0.0
    %373 = vmatpush.xpose.msra.mxu0 0.0
    %374 = vmatpush.xpose.msra.mxu0 0.0
    %375 = vmatpush.xpose.msra.mxu0 0.0
    %376 = vmatpush.xpose.msra.mxu0 0.0
    %377 = vmatpush.xpose.msra.mxu0 0.0
    %378 = vmatpush.xpose.msra.mxu0 0.0
    %379 = vmatpush.xpose.msra.mxu0 0.0
    %380 = vmatpush.xpose.msra.mxu0 0.0
    %381 = vmatpush.xpose.msra.mxu0 0.0
    %382 = vmatpush.xpose.msra.mxu0 0.0
    %383 = vmatpush.xpose.msra.mxu0 %v367
    %384 = vmatpush.xpose.msra.mxu0 %v364
    %385 = vmatmul.f32.gmra.mxu0 %v361
    %v386 = vpop.f32.mrf.mxu0
    %v387 = vadd.f32 0.0, %v386
    %388 = vdwg.mxu0
    %389 = vset.pattern.permute.xlu0 32
    %390 = vperm.xlu0 %389, %v353
    %v391 = vpop.permute.xlu0 %390
    %393 = vset.pattern.permute.xlu0 32
    %394 = vperm.xlu0 %393, %v356
    %v395 = vpop.permute.xlu0 %394
    %v397 = vperm.slane %v387, 0
    %v398 = vadd.f32 %v391, %v397
    %v399 = vadd.f32 %v395, %v397
    %vm400 = vcmp.gt.f32.partialorder %v398, 0.0
    %vm401 = vcmp.gt.f32.partialorder %v399, 0.0
    %v402 = vmul.f32 %v398, 0.2
    %v403 = vmul.f32 %v399, 0.2
    %v404 = vsel %vm400, %v398, %v402
    %v405 = vsel %vm401, %v399, %v403
    %v406 = vadd.f32 %v404, %v323
    %v407 = vadd.f32 %v405, %v324
    %vm408 = vcmask 97280
    %v409 = vsel %vm408, %v406, -inf
    %410 = vmax.xlane.f32.xlu0 %v409
    %v411 = vpop.xlane.xlu0 %410
    %vm412 = vcmask 93184
    %v413 = vsel %vm412, %v407, -inf
    %414 = vmax.xlane.f32.xlu0 %v413
    %v415 = vpop.xlane.xlu0 %414
    %v416 = vsub.f32 %v406, %v411
    %v417 = vsub.f32 %v407, %v415
    %v418 = vmul.f32 %v416, 1.442695
    %v419 = vpow.pop %v418
    %v420 = vmul.f32 %v417, 1.442695
    %v421 = vpow.pop %v420
    %v422 = vsel %vm408, %v419, 0.0
    %423 = vadd.xlane.f32.xlu0 %v422
    %v424 = vpop.xlane.xlu0 %423
    %v425 = vsel %vm412, %v421, 0.0
    %426 = vadd.xlane.f32.xlu0 %v425
    %v427 = vpop.xlane.xlu0 %426
    %v428 = vrcp.pop %v424
    %v429 = vrcp.pop %v427
    %v430 = vmul.f32 %v419, %v428
    %v431 = vmul.f32 %v421, %v429
    %v432 = vperm.slane %v359, 0
    %v434 = vsel %vm408, %v430, 0
    %v437 = vsel %vm408, %v431, 0
    %v439 = vsel %vm51, %v356, 0
    %441 = vmatpush.msra.mxu0 0.0
    %442 = vmatpush.msra.mxu0 0.0
    %443 = vmatpush.msra.mxu0 0.0
    %444 = vmatpush.msra.mxu0 0.0
    %445 = vmatpush.msra.mxu0 0.0
    %446 = vmatpush.msra.mxu0 0.0
    %447 = vmatpush.msra.mxu0 0.0
    %448 = vmatpush.msra.mxu0 0.0
    %449 = vmatpush.msra.mxu0 0.0
    %450 = vmatpush.msra.mxu0 0.0
    %451 = vmatpush.msra.mxu0 0.0
    %452 = vmatpush.msra.mxu0 0.0
    %453 = vmatpush.msra.mxu0 0.0
    %454 = vmatpush.msra.mxu0 0.0
    %455 = vmatpush.msra.mxu0 %v439
    %456 = vmatpush.msra.mxu0 %v353
    %457 = vmatmul.f32.gmra.mxu0 %v434
    %v458 = vpop.f32.mrf.mxu0
    %v459 = vadd.f32 %v432, %v458
    %460 = vmatmul.f32.gmra.mxu0 %v437
    %v461 = vpop.f32.mrf.mxu0
    %v462 = vadd.f32 %v432, %v461
    %463 = vdwg.mxu0
    %v464 = vmax.f32 %v459, 0.0
    %v465 = vmax.f32 %v462, 0.0
    %v466 = vld [vmem:[#allocation2 + $0x48] sm:$0xff]
    %v467 = vld [vmem:[#allocation2 + $0x50] sm:$0xff]
    %v468 = vld [vmem:[#allocation2 + $0x58] sm:$0xff]
    %v469 = vld [vmem:[#allocation2 + $0x60] sm:$0xff]
    %v471 = vsel %vm80, %v464, 0
    %v474 = vsel %vm80, %v465, 0
    %476 = vmatpush.msra.mxu0 0.0
    %477 = vmatpush.msra.mxu0 0.0
    %478 = vmatpush.msra.mxu0 0.0
    %479 = vmatpush.msra.mxu0 0.0
    %480 = vmatpush.msra.mxu0 0.0
    %481 = vmatpush.msra.mxu0 0.0
    %482 = vmatpush.msra.mxu0 0.0
    %483 = vmatpush.msra.mxu0 0.0
    %484 = vmatpush.msra.mxu0 0.0
    %485 = vmatpush.msra.mxu0 0.0
    %486 = vmatpush.msra.mxu0 0.0
    %487 = vmatpush.msra.mxu0 0.0
    %488 = vmatpush.msra.mxu0 %v469
    %489 = vmatpush.msra.mxu0 %v468
    %490 = vmatpush.msra.mxu0 %v467
    %491 = vmatpush.msra.mxu0 %v466
    %492 = vmatmul.f32.gmra.mxu0 %v471
    %v493 = vpop.f32.mrf.mxu0
    %v494 = vadd.f32 0.0, %v493
    %495 = vmatmul.f32.gmra.mxu0 %v474
    %v496 = vpop.f32.mrf.mxu0
    %v497 = vadd.f32 0.0, %v496
    %498 = vdwg.mxu0
    %v499 = vld [vmem:[#allocation2 + $0x68] sm:$0x1]
    %v500 = vld [vmem:[#allocation2 + $0x69] sm:$0x1]
    %v502 = vsel %vm80, %v499, 0
    %v505 = vsel %vm80, %v494, 0
    %v508 = vsel %vm80, %v497, 0
    %510 = vmatpush.xpose.msra.mxu0 0.0
    %511 = vmatpush.xpose.msra.mxu0 0.0
    %512 = vmatpush.xpose.msra.mxu0 0.0
    %513 = vmatpush.xpose.msra.mxu0 0.0
    %514 = vmatpush.xpose.msra.mxu0 0.0
    %515 = vmatpush.xpose.msra.mxu0 0.0
    %516 = vmatpush.xpose.msra.mxu0 0.0
    %517 = vmatpush.xpose.msra.mxu0 0.0
    %518 = vmatpush.xpose.msra.mxu0 0.0
    %519 = vmatpush.xpose.msra.mxu0 0.0
    %520 = vmatpush.xpose.msra.mxu0 0.0
    %521 = vmatpush.xpose.msra.mxu0 0.0
    %522 = vmatpush.xpose.msra.mxu0 0.0
    %523 = vmatpush.xpose.msra.mxu0 0.0
    %524 = vmatpush.xpose.msra.mxu0 %v508
    %525 = vmatpush.xpose.msra.mxu0 %v505
    %526 = vmatmul.f32.gmra.mxu0 %v502
    %v527 = vpop.f32.mrf.mxu0
    %v528 = vadd.f32 0.0, %v527
    %529 = vdwg.mxu0
    %530 = vset.pattern.permute.xlu0 32
    %531 = vperm.xlu0 %530, %v494
    %v532 = vpop.permute.xlu0 %531
    %534 = vset.pattern.permute.xlu0 32
    %535 = vperm.xlu0 %534, %v497
    %v536 = vpop.permute.xlu0 %535
    %v538 = vperm.slane %v528, 0
    %v539 = vadd.f32 %v532, %v538
    %v540 = vadd.f32 %v536, %v538
    %vm541 = vcmp.gt.f32.partialorder %v539, 0.0
    %vm542 = vcmp.gt.f32.partialorder %v540, 0.0
    %v543 = vmul.f32 %v539, 0.2
    %v544 = vmul.f32 %v540, 0.2
    %v545 = vsel %vm541, %v539, %v543
    %v546 = vsel %vm542, %v540, %v544
    %v547 = vadd.f32 %v545, %v323
    %v548 = vadd.f32 %v546, %v324
    %v549 = vsel %vm408, %v547, -inf
    %550 = vmax.xlane.f32.xlu0 %v549
    %v551 = vpop.xlane.xlu0 %550
    %v552 = vsel %vm412, %v548, -inf
    %553 = vmax.xlane.f32.xlu0 %v552
    %v554 = vpop.xlane.xlu0 %553
    %v555 = vsub.f32 %v547, %v551
    %v556 = vsub.f32 %v548, %v554
    %v557 = vmul.f32 %v555, 1.442695
    %v558 = vpow.pop %v557
    %v559 = vmul.f32 %v556, 1.442695
    %v560 = vpow.pop %v559
    %v561 = vsel %vm408, %v558, 0.0
    %562 = vadd.xlane.f32.xlu0 %v561
    %v563 = vpop.xlane.xlu0 %562
    %v564 = vsel %vm412, %v560, 0.0
    %565 = vadd.xlane.f32.xlu0 %v564
    %v566 = vpop.xlane.xlu0 %565
    %v567 = vrcp.pop %v563
    %v568 = vrcp.pop %v566
    %v569 = vmul.f32 %v558, %v567
    %v570 = vmul.f32 %v560, %v568
    %v571 = vperm.slane %v500, 0
    %v573 = vsel %vm408, %v569, 0
    %v576 = vsel %vm408, %v570, 0
    %v578 = vsel %vm51, %v497, 0
    %580 = vmatpush.msra.mxu0 0.0
    %581 = vmatpush.msra.mxu0 0.0
    %582 = vmatpush.msra.mxu0 0.0
    %583 = vmatpush.msra.mxu0 0.0
    %584 = vmatpush.msra.mxu0 0.0
    %585 = vmatpush.msra.mxu0 0.0
    %586 = vmatpush.msra.mxu0 0.0
    %587 = vmatpush.msra.mxu0 0.0
    %588 = vmatpush.msra.mxu0 0.0
    %589 = vmatpush.msra.mxu0 0.0
    %590 = vmatpush.msra.mxu0 0.0
    %591 = vmatpush.msra.mxu0 0.0
    %592 = vmatpush.msra.mxu0 0.0
    %593 = vmatpush.msra.mxu0 0.0
    %594 = vmatpush.msra.mxu0 %v578
    %595 = vmatpush.msra.mxu0 %v494
    %596 = vmatmul.f32.gmra.mxu0 %v573
    %v597 = vpop.f32.mrf.mxu0
    %v598 = vadd.f32 %v571, %v597
    %599 = vmatmul.f32.gmra.mxu0 %v576
    %v600 = vpop.f32.mrf.mxu0
    %v601 = vadd.f32 %v571, %v600
    %602 = vdwg.mxu0
    %v603 = vmax.f32 %v598, 0.0
    %v604 = vmax.f32 %v601, 0.0
    %v605 = vld [vmem:[#allocation2 + $0x70] sm:$0xff]
    %v606 = vld [vmem:[#allocation2 + $0x78] sm:$0xff]
    %v607 = vld [vmem:[#allocation2 + $0x80] sm:$0xff]
    %v608 = vld [vmem:[#allocation2 + $0x88] sm:$0xff]
    %v609 = vld [vmem:[#allocation2 + $0x90] sm:$0x1]
    %v610 = vperm.slane %v609, 0
    %v612 = vsel %vm80, %v319, 0
    %v615 = vsel %vm80, %v320, 0
    %v618 = vsel %vm80, %v603, 0
    %v621 = vsel %vm80, %v604, 0
    %623 = vmatpush.msra.mxu0 0.0
    %624 = vmatpush.msra.mxu0 0.0
    %625 = vmatpush.msra.mxu0 0.0
    %626 = vmatpush.msra.mxu0 0.0
    %627 = vmatpush.msra.mxu0 0.0
    %628 = vmatpush.msra.mxu0 0.0
    %629 = vmatpush.msra.mxu0 0.0
    %630 = vmatpush.msra.mxu0 0.0
    %631 = vmatpush.msra.mxu0 0.0
    %632 = vmatpush.msra.mxu0 0.0
    %633 = vmatpush.msra.mxu0 0.0
    %634 = vmatpush.msra.mxu0 0.0
    %635 = vmatpush.msra.mxu0 %v608
    %636 = vmatpush.msra.mxu0 %v607
    %637 = vmatpush.msra.mxu0 %v606
    %638 = vmatpush.msra.mxu0 %v605
    %639 = vmatmul.f32.gmra.mxu0 %v612
    %v640 = vpop.f32.mrf.mxu0
    %v641 = vadd.f32 %v610, %v640
    %642 = vmatmul.f32.gmra.mxu0 %v615
    %v643 = vpop.f32.mrf.mxu0
    %v644 = vadd.f32 %v610, %v643
    %645 = vmatmul.f32.gmra.mxu0 %v618
    %v646 = vpop.f32.mrf.mxu0
    %v647 = vadd.f32 %v610, %v646
    %648 = vmatmul.f32.gmra.mxu0 %v621
    %v649 = vpop.f32.mrf.mxu0
    %v650 = vadd.f32 %v610, %v649
    %651 = vdwg.mxu0
    %v653 = vsel %vm80, %v641, 0
    %v656 = vsel %vm80, %v644, 0
    %v659 = vsel %vm80, %v647, 0
    %v662 = vsel %vm80, %v650, 0
    %664 = vmatpush.xpose.msra.mxu0 0.0
    %665 = vmatpush.xpose.msra.mxu0 0.0
    %666 = vmatpush.xpose.msra.mxu0 0.0
    %667 = vmatpush.xpose.msra.mxu0 0.0
    %668 = vmatpush.xpose.msra.mxu0 0.0
    %669 = vmatpush.xpose.msra.mxu0 0.0
    %670 = vmatpush.xpose.msra.mxu0 0.0
    %671 = vmatpush.xpose.msra.mxu0 0.0
    %672 = vmatpush.xpose.msra.mxu0 0.0
    %673 = vmatpush.xpose.msra.mxu0 0.0
    %674 = vmatpush.xpose.msra.mxu0 0.0
    %675 = vmatpush.xpose.msra.mxu0 0.0
    %676 = vmatpush.xpose.msra.mxu0 0.0
    %677 = vmatpush.xpose.msra.mxu0 0.0
    %678 = vmatpush.xpose.msra.mxu0 %v662
    %679 = vmatpush.xpose.msra.mxu0 %v659
    %680 = vmatmul.f32.gmra.mxu0 %v653
    %v681 = vpop.f32.mrf.mxu0
    %v682 = vadd.f32 0.0, %v681
    %683 = vmatmul.f32.gmra.mxu0 %v656
    %v684 = vpop.f32.mrf.mxu0
    %v685 = vadd.f32 0.0, %v684
    %686 = vdwg.mxu0
    %v687 = vsel %vm408, %v682, -inf
    %688 = vmax.xlane.f32.xlu0 %v687
    %v689 = vpop.xlane.xlu0 %688
    %v690 = vsel %vm408, %v685, -inf
    %691 = vmax.xlane.f32.xlu0 %v690
    %v692 = vpop.xlane.xlu0 %691
    %v693 = vsub.f32 %v682, %v689
    %v694 = vsub.f32 %v685, %v692
    %v695 = vmul.f32 %v693, 1.442695
    %v696 = vpow.pop %v695
    %v697 = vmul.f32 %v694, 1.442695
    %v698 = vpow.pop %v697
    %v699 = vsel %vm408, %v696, 0.0
    %700 = vadd.xlane.f32.xlu0 %v699
    %v701 = vpop.xlane.xlu0 %700
    %v702 = vsel %vm408, %v698, 0.0
    %703 = vadd.xlane.f32.xlu0 %v702
    %v704 = vpop.xlane.xlu0 %703
    %v705 = vrcp.pop %v701
    %v706 = vrcp.pop %v704
    %v707 = vmul.f32 %v696, %v705
    %v708 = vmul.f32 %v698, %v706
    %v710 = vsel %vm408, %v707, 0
    %v713 = vsel %vm408, %v708, 0
    %v715 = vsel %vm51, %v604, 0
    %717 = vmatpush.msra.mxu0 0.0
    %718 = vmatpush.msra.mxu0 0.0
    %719 = vmatpush.msra.mxu0 0.0
    %720 = vmatpush.msra.mxu0 0.0
    %721 = vmatpush.msra.mxu0 0.0
    %722 = vmatpush.msra.mxu0 0.0
    %723 = vmatpush.msra.mxu0 0.0
    %724 = vmatpush.msra.mxu0 0.0
    %725 = vmatpush.msra.mxu0 0.0
    %726 = vmatpush.msra.mxu0 0.0
    %727 = vmatpush.msra.mxu0 0.0
    %728 = vmatpush.msra.mxu0 0.0
    %729 = vmatpush.msra.mxu0 0.0
    %730 = vmatpush.msra.mxu0 0.0
    %731 = vmatpush.msra.mxu0 %v715
    %732 = vmatpush.msra.mxu0 %v603
    %733 = vmatmul.f32.gmra.mxu0 %v710
    %v734 = vpop.f32.mrf.mxu0
    %v735 = vadd.f32 0.0, %v734
    %736 = vmatmul.f32.gmra.mxu0 %v713
    %v737 = vpop.f32.mrf.mxu0
    %v738 = vadd.f32 0.0, %v737
    %739 = vdwg.mxu0
    %740 = vrot.lane.b32.xlu0 %v641, 96
    %v741 = vpop.permute.xlu0 %740
    %742 = vrot.lane.b32.xlu0 %v644, 96
    %v743 = vpop.permute.xlu0 %742
    %744 = vrot.lane.b32.xlu0 %v647, 96
    %v745 = vpop.permute.xlu0 %744
    %746 = vrot.lane.b32.xlu0 %v650, 96
    %v747 = vpop.permute.xlu0 %746
    %v748 = vsel %vm80, %v741, 0
    %v750 = vsel %vm80, %v743, 0
    %v752 = vsel %vm80, %v745, 0
    %v754 = vsel %vm80, %v747, 0
    %756 = vmatpush.xpose.msra.mxu0 0.0
    %757 = vmatpush.xpose.msra.mxu0 0.0
    %758 = vmatpush.xpose.msra.mxu0 0.0
    %759 = vmatpush.xpose.msra.mxu0 0.0
    %760 = vmatpush.xpose.msra.mxu0 0.0
    %761 = vmatpush.xpose.msra.mxu0 0.0
    %762 = vmatpush.xpose.msra.mxu0 0.0
    %763 = vmatpush.xpose.msra.mxu0 0.0
    %764 = vmatpush.xpose.msra.mxu0 0.0
    %765 = vmatpush.xpose.msra.mxu0 0.0
    %766 = vmatpush.xpose.msra.mxu0 0.0
    %767 = vmatpush.xpose.msra.mxu0 0.0
    %768 = vmatpush.xpose.msra.mxu0 0.0
    %769 = vmatpush.xpose.msra.mxu0 0.0
    %770 = vmatpush.xpose.msra.mxu0 %v754
    %771 = vmatpush.xpose.msra.mxu0 %v752
    %772 = vmatmul.f32.gmra.mxu0 %v748
    %v773 = vpop.f32.mrf.mxu0
    %v774 = vadd.f32 0.0, %v773
    %775 = vmatmul.f32.gmra.mxu0 %v750
    %v776 = vpop.f32.mrf.mxu0
    %v777 = vadd.f32 0.0, %v776
    %778 = vdwg.mxu0
    %v779 = vsel %vm408, %v774, -inf
    %780 = vmax.xlane.f32.xlu0 %v779
    %v781 = vpop.xlane.xlu0 %780
    %v782 = vsel %vm408, %v777, -inf
    %783 = vmax.xlane.f32.xlu0 %v782
    %v784 = vpop.xlane.xlu0 %783
    %v785 = vsub.f32 %v774, %v781
    %v786 = vsub.f32 %v777, %v784
    %v787 = vmul.f32 %v785, 1.442695
    %v788 = vpow.pop %v787
    %v789 = vmul.f32 %v786, 1.442695
    %v790 = vpow.pop %v789
    %v791 = vsel %vm408, %v788, 0.0
    %792 = vadd.xlane.f32.xlu0 %v791
    %v793 = vpop.xlane.xlu0 %792
    %v794 = vsel %vm408, %v790, 0.0
    %795 = vadd.xlane.f32.xlu0 %v794
    %v796 = vpop.xlane.xlu0 %795
    %v797 = vrcp.pop %v793
    %v798 = vrcp.pop %v796
    %v799 = vmul.f32 %v788, %v797
    %v800 = vmul.f32 %v790, %v798
    %v802 = vsel %vm408, %v799, 0
    %v805 = vsel %vm408, %v800, 0
    %807 = vmatpush.msra.mxu0 0.0
    %808 = vmatpush.msra.mxu0 0.0
    %809 = vmatpush.msra.mxu0 0.0
    %810 = vmatpush.msra.mxu0 0.0
    %811 = vmatpush.msra.mxu0 0.0
    %812 = vmatpush.msra.mxu0 0.0
    %813 = vmatpush.msra.mxu0 0.0
    %814 = vmatpush.msra.mxu0 0.0
    %815 = vmatpush.msra.mxu0 0.0
    %816 = vmatpush.msra.mxu0 0.0
    %817 = vmatpush.msra.mxu0 0.0
    %818 = vmatpush.msra.mxu0 0.0
    %819 = vmatpush.msra.mxu0 0.0
    %820 = vmatpush.msra.mxu0 0.0
    %821 = vmatpush.msra.mxu0 %v715
    %822 = vmatpush.msra.mxu0 %v603
    %823 = vmatmul.f32.gmra.mxu0 %v802
    %v824 = vpop.f32.mrf.mxu0
    %v825 = vadd.f32 0.0, %v824
    %826 = vmatmul.f32.gmra.mxu0 %v805
    %v827 = vpop.f32.mrf.mxu0
    %v828 = vadd.f32 0.0, %v827
    %829 = vdwg.mxu0
    %830 = vrot.lane.b32.xlu0 %v641, 64
    %v831 = vpop.permute.xlu0 %830
    %832 = vrot.lane.b32.xlu0 %v644, 64
    %v833 = vpop.permute.xlu0 %832
    %834 = vrot.lane.b32.xlu0 %v647, 64
    %v835 = vpop.permute.xlu0 %834
    %836 = vrot.lane.b32.xlu0 %v650, 64
    %v837 = vpop.permute.xlu0 %836
    %v838 = vsel %vm80, %v831, 0
    %v840 = vsel %vm80, %v833, 0
    %v842 = vsel %vm80, %v835, 0
    %v844 = vsel %vm80, %v837, 0
    %846 = vmatpush.xpose.msra.mxu0 0.0
    %847 = vmatpush.xpose.msra.mxu0 0.0
    %848 = vmatpush.xpose.msra.mxu0 0.0
    %849 = vmatpush.xpose.msra.mxu0 0.0
    %850 = vmatpush.xpose.msra.mxu0 0.0
    %851 = vmatpush.xpose.msra.mxu0 0.0
    %852 = vmatpush.xpose.msra.mxu0 0.0
    %853 = vmatpush.xpose.msra.mxu0 0.0
    %854 = vmatpush.xpose.msra.mxu0 0.0
    %855 = vmatpush.xpose.msra.mxu0 0.0
    %856 = vmatpush.xpose.msra.mxu0 0.0
    %857 = vmatpush.xpose.msra.mxu0 0.0
    %858 = vmatpush.xpose.msra.mxu0 0.0
    %859 = vmatpush.xpose.msra.mxu0 0.0
    %860 = vmatpush.xpose.msra.mxu0 %v844
    %861 = vmatpush.xpose.msra.mxu0 %v842
    %862 = vmatmul.f32.gmra.mxu0 %v838
    %v863 = vpop.f32.mrf.mxu0
    %v864 = vadd.f32 0.0, %v863
    %865 = vmatmul.f32.gmra.mxu0 %v840
    %v866 = vpop.f32.mrf.mxu0
    %v867 = vadd.f32 0.0, %v866
    %868 = vdwg.mxu0
    %v869 = vsel %vm408, %v864, -inf
    %870 = vmax.xlane.f32.xlu0 %v869
    %v871 = vpop.xlane.xlu0 %870
    %v872 = vsel %vm408, %v867, -inf
    %873 = vmax.xlane.f32.xlu0 %v872
    %v874 = vpop.xlane.xlu0 %873
    %v875 = vsub.f32 %v864, %v871
    %v876 = vsub.f32 %v867, %v874
    %v877 = vmul.f32 %v875, 1.442695
    %v878 = vpow.pop %v877
    %v879 = vmul.f32 %v876, 1.442695
    %v880 = vpow.pop %v879
    %v881 = vsel %vm408, %v878, 0.0
    %882 = vadd.xlane.f32.xlu0 %v881
    %v883 = vpop.xlane.xlu0 %882
    %v884 = vsel %vm408, %v880, 0.0
    %885 = vadd.xlane.f32.xlu0 %v884
    %v886 = vpop.xlane.xlu0 %885
    %v887 = vrcp.pop %v883
    %v888 = vrcp.pop %v886
    %v889 = vmul.f32 %v878, %v887
    %v890 = vmul.f32 %v880, %v888
    %v892 = vsel %vm408, %v889, 0
    %v895 = vsel %vm408, %v890, 0
    %897 = vmatpush.msra.mxu0 0.0
    %898 = vmatpush.msra.mxu0 0.0
    %899 = vmatpush.msra.mxu0 0.0
    %900 = vmatpush.msra.mxu0 0.0
    %901 = vmatpush.msra.mxu0 0.0
    %902 = vmatpush.msra.mxu0 0.0
    %903 = vmatpush.msra.mxu0 0.0
    %904 = vmatpush.msra.mxu0 0.0
    %905 = vmatpush.msra.mxu0 0.0
    %906 = vmatpush.msra.mxu0 0.0
    %907 = vmatpush.msra.mxu0 0.0
    %908 = vmatpush.msra.mxu0 0.0
    %909 = vmatpush.msra.mxu0 0.0
    %910 = vmatpush.msra.mxu0 0.0
    %911 = vmatpush.msra.mxu0 %v715
    %912 = vmatpush.msra.mxu0 %v603
    %913 = vmatmul.f32.gmra.mxu0 %v892
    %v914 = vpop.f32.mrf.mxu0
    %v915 = vadd.f32 0.0, %v914
    %916 = vmatmul.f32.gmra.mxu0 %v895
    %v917 = vpop.f32.mrf.mxu0
    %v918 = vadd.f32 0.0, %v917
    %919 = vdwg.mxu0
    %920 = vrot.lane.b32.xlu0 %v641, 32
    %v921 = vpop.permute.xlu0 %920
    %922 = vrot.lane.b32.xlu0 %v644, 32
    %v923 = vpop.permute.xlu0 %922
    %924 = vrot.lane.b32.xlu0 %v647, 32
    %v925 = vpop.permute.xlu0 %924
    %926 = vrot.lane.b32.xlu0 %v650, 32
    %v927 = vpop.permute.xlu0 %926
    %v928 = vsel %vm80, %v921, 0
    %v930 = vsel %vm80, %v923, 0
    %v932 = vsel %vm80, %v925, 0
    %v934 = vsel %vm80, %v927, 0
    %936 = vmatpush.xpose.msra.mxu0 0.0
    %937 = vmatpush.xpose.msra.mxu0 0.0
    %938 = vmatpush.xpose.msra.mxu0 0.0
    %939 = vmatpush.xpose.msra.mxu0 0.0
    %940 = vmatpush.xpose.msra.mxu0 0.0
    %941 = vmatpush.xpose.msra.mxu0 0.0
    %942 = vmatpush.xpose.msra.mxu0 0.0
    %943 = vmatpush.xpose.msra.mxu0 0.0
    %944 = vmatpush.xpose.msra.mxu0 0.0
    %945 = vmatpush.xpose.msra.mxu0 0.0
    %946 = vmatpush.xpose.msra.mxu0 0.0
    %947 = vmatpush.xpose.msra.mxu0 0.0
    %948 = vmatpush.xpose.msra.mxu0 0.0
    %949 = vmatpush.xpose.msra.mxu0 0.0
    %950 = vmatpush.xpose.msra.mxu0 %v934
    %951 = vmatpush.xpose.msra.mxu0 %v932
    %952 = vmatmul.f32.gmra.mxu0 %v928
    %v953 = vpop.f32.mrf.mxu0
    %v954 = vadd.f32 0.0, %v953
    %955 = vmatmul.f32.gmra.mxu0 %v930
    %v956 = vpop.f32.mrf.mxu0
    %v957 = vadd.f32 0.0, %v956
    %958 = vdwg.mxu0
    %v959 = vsel %vm408, %v954, -inf
    %960 = vmax.xlane.f32.xlu0 %v959
    %v961 = vpop.xlane.xlu0 %960
    %v962 = vsel %vm408, %v957, -inf
    %963 = vmax.xlane.f32.xlu0 %v962
    %v964 = vpop.xlane.xlu0 %963
    %v965 = vsub.f32 %v954, %v961
    %v966 = vsub.f32 %v957, %v964
    %v967 = vmul.f32 %v965, 1.442695
    %v968 = vpow.pop %v967
    %v969 = vmul.f32 %v966, 1.442695
    %v970 = vpow.pop %v969
    %v971 = vsel %vm408, %v968, 0.0
    %972 = vadd.xlane.f32.xlu0 %v971
    %v973 = vpop.xlane.xlu0 %972
    %v974 = vsel %vm408, %v970, 0.0
    %975 = vadd.xlane.f32.xlu0 %v974
    %v976 = vpop.xlane.xlu0 %975
    %v977 = vrcp.pop %v973
    %v978 = vrcp.pop %v976
    %v979 = vmul.f32 %v968, %v977
    %v980 = vmul.f32 %v970, %v978
    %v982 = vsel %vm408, %v979, 0
    %v985 = vsel %vm408, %v980, 0
    %987 = vmatpush.msra.mxu0 0.0
    %988 = vmatpush.msra.mxu0 0.0
    %989 = vmatpush.msra.mxu0 0.0
    %990 = vmatpush.msra.mxu0 0.0
    %991 = vmatpush.msra.mxu0 0.0
    %992 = vmatpush.msra.mxu0 0.0
    %993 = vmatpush.msra.mxu0 0.0
    %994 = vmatpush.msra.mxu0 0.0
    %995 = vmatpush.msra.mxu0 0.0
    %996 = vmatpush.msra.mxu0 0.0
    %997 = vmatpush.msra.mxu0 0.0
    %998 = vmatpush.msra.mxu0 0.0
    %999 = vmatpush.msra.mxu0 0.0
    %1000 = vmatpush.msra.mxu0 0.0
    %1001 = vmatpush.msra.mxu0 %v715
    %1002 = vmatpush.msra.mxu0 %v603
    %1003 = vmatmul.f32.gmra.mxu0 %v982
    %v1004 = vpop.f32.mrf.mxu0
    %v1005 = vadd.f32 0.0, %v1004
    %1006 = vmatmul.f32.gmra.mxu0 %v985
    %v1007 = vpop.f32.mrf.mxu0
    %v1008 = vadd.f32 0.0, %v1007
    %1009 = vdwg.mxu0
    %1012 = vrot.lane.b32.xlu0 %v825, 32
    %v1013 = vpop.permute.xlu0 %1012
    %1014 = vrot.lane.b32.xlu0 %v828, 32
    %v1015 = vpop.permute.xlu0 %1014
    %1020 = vrot.lane.b32.xlu0 %v915, 64
    %v1021 = vpop.permute.xlu0 %1020
    %1022 = vrot.lane.b32.xlu0 %v918, 64
    %v1023 = vpop.permute.xlu0 %1022
    %1028 = vrot.lane.b32.xlu0 %v1005, 96
    %v1029 = vpop.permute.xlu0 %1028
    %1030 = vrot.lane.b32.xlu0 %v1008, 96
    %v1031 = vpop.permute.xlu0 %1030
    %v1034 = vsel %vm80, %v735, %v1013
    %v1035 = vsel %vm80, %v738, %v1015
    %vm1036 = vcmask 523264
    %v1037 = vsel %vm1036, %v1034, %v1021
    %v1038 = vsel %vm1036, %v1035, %v1023
    %vm1039 = vcmask 785408
    %v1040 = vsel %vm1039, %v1037, %v1029
    %v1041 = vsel %vm1039, %v1038, %v1031
    %v1042 = vld [vmem:[#allocation2 + $0x98] sm:$0xff]
    %v1043 = vld [vmem:[#allocation2 + $0xa0] sm:$0xff]
    %v1044 = vld [vmem:[#allocation2 + $0xa8] sm:$0xff]
    %v1045 = vld [vmem:[#allocation2 + $0xb0] sm:$0xff]
    %v1046 = vld [vmem:[#allocation2 + $0xb8] sm:$0xff]
    %v1047 = vld [vmem:[#allocation2 + $0xc0] sm:$0xff]
    %v1048 = vld [vmem:[#allocation2 + $0xc8] sm:$0xff]
    %v1049 = vld [vmem:[#allocation2 + $0xd0] sm:$0xff]
    %v1050 = vld [vmem:[#allocation2 + $0xd8] sm:$0xff]
    %v1051 = vld [vmem:[#allocation2 + $0xe0] sm:$0xff]
    %v1052 = vld [vmem:[#allocation2 + $0xe8] sm:$0xff]
    %v1053 = vld [vmem:[#allocation2 + $0xf0] sm:$0xff]
    %v1054 = vld [vmem:[#allocation2 + $0xf8] sm:$0xff]
    %v1055 = vld [vmem:[#allocation2 + $0x100] sm:$0xff]
    %v1056 = vld [vmem:[#allocation2 + $0x108] sm:$0xff]
    %v1057 = vld [vmem:[#allocation2 + $0x110] sm:$0xff]
    %v1058 = vld [vmem:[#allocation2 + $0x118] sm:$0xff]
    %v1059 = vld [vmem:[#allocation2 + $0x120] sm:$0xff]
    %v1060 = vld [vmem:[#allocation2 + $0x128] sm:$0xff]
    %v1061 = vld [vmem:[#allocation2 + $0x130] sm:$0xff]
    %1062 = vmatpush.msra.mxu0 %v1061
    %1063 = vmatpush.msra.mxu0 %v1060
    %1064 = vmatpush.msra.mxu0 %v1059
    %1065 = vmatpush.msra.mxu0 %v1058
    %1066 = vmatpush.msra.mxu0 %v1057
    %1067 = vmatpush.msra.mxu0 %v1056
    %1068 = vmatpush.msra.mxu0 %v1055
    %1069 = vmatpush.msra.mxu0 %v1054
    %1070 = vmatpush.msra.mxu0 %v1053
    %1071 = vmatpush.msra.mxu0 %v1052
    %1072 = vmatpush.msra.mxu0 %v1051
    %1073 = vmatpush.msra.mxu0 %v1050
    %1074 = vmatpush.msra.mxu0 %v1049
    %1075 = vmatpush.msra.mxu0 %v1048
    %1076 = vmatpush.msra.mxu0 %v1047
    %1077 = vmatpush.msra.mxu0 %v1046
    %1078 = vmatmul.f32.gmra.mxu0 %v1040
    %v1079 = vpop.f32.mrf.mxu0
    %v1080 = vadd.f32 0.0, %v1079
    %1081 = vmatmul.f32.gmra.mxu0 %v1041
    %v1082 = vpop.f32.mrf.mxu0
    %v1083 = vadd.f32 0.0, %v1082
    %1084 = vdwg.mxu0
    %1085 = vmatpush.msra.mxu0 0.0
    %1086 = vmatpush.msra.mxu0 0.0
    %1087 = vmatpush.msra.mxu0 0.0
    %1088 = vmatpush.msra.mxu0 0.0
    %1089 = vmatpush.msra.mxu0 0.0
    %1090 = vmatpush.msra.mxu0 0.0
    %1091 = vmatpush.msra.mxu0 0.0
    %1092 = vmatpush.msra.mxu0 0.0
    %1093 = vmatpush.msra.mxu0 0.0
    %1094 = vmatpush.msra.mxu0 0.0
    %1095 = vmatpush.msra.mxu0 0.0
    %1096 = vmatpush.msra.mxu0 0.0
    %1097 = vmatpush.msra.mxu0 %v1045
    %1098 = vmatpush.msra.mxu0 %v1044
    %1099 = vmatpush.msra.mxu0 %v1043
    %1100 = vmatpush.msra.mxu0 %v1042
    %1101 = vmatmul.f32.gmra.mxu0 %v612
    %v1102 = vpop.f32.mrf.mxu0
    %v1103 = vadd.f32 %v1080, %v1102
    %1104 = vmatmul.f32.gmra.mxu0 %v615
    %v1105 = vpop.f32.mrf.mxu0
    %v1106 = vadd.f32 %v1083, %v1105
    %1107 = vdwg.mxu0
    %v1108 = vld [vmem:[#allocation2 + $0x138] sm:$0x1]
    %v1109 = vperm.slane %v1108, 0
    %v1110 = vadd.f32 %v1103, %v1109
    %v1111 = vadd.f32 %v1106, %v1109
    %v1112 = vmax.f32 %v1110, 0.0
    %v1113 = vmax.f32 %v1111, 0.0
    %v1114 = vld [vmem:[#allocation2 + $0x140] sm:$0xff]
    %v1115 = vld [vmem:[#allocation2 + $0x148] sm:$0xff]
    %v1116 = vld [vmem:[#allocation2 + $0x150] sm:$0xff]
    %v1117 = vld [vmem:[#allocation2 + $0x158] sm:$0xff]
    %v1118 = vld [vmem:[#allocation2 + $0x160] sm:$0x1]
    %v1119 = vperm.slane %v1118, 0
    %v1121 = vsel %vm80, %v1112, 0
    %v1124 = vsel %vm80, %v1113, 0
    %1126 = vmatpush.msra.mxu0 0.0
    %1127 = vmatpush.msra.mxu0 0.0
    %1128 = vmatpush.msra.mxu0 0.0
    %1129 = vmatpush.msra.mxu0 0.0
    %1130 = vmatpush.msra.mxu0 0.0
    %1131 = vmatpush.msra.mxu0 0.0
    %1132 = vmatpush.msra.mxu0 0.0
    %1133 = vmatpush.msra.mxu0 0.0
    %1134 = vmatpush.msra.mxu0 0.0
    %1135 = vmatpush.msra.mxu0 0.0
    %1136 = vmatpush.msra.mxu0 0.0
    %1137 = vmatpush.msra.mxu0 0.0
    %1138 = vmatpush.msra.mxu0 %v1117
    %1139 = vmatpush.msra.mxu0 %v1116
    %1140 = vmatpush.msra.mxu0 %v1115
    %1141 = vmatpush.msra.mxu0 %v1114
    %1142 = vmatmul.f32.gmra.mxu0 %v1121
    %v1143 = vpop.f32.mrf.mxu0
    %v1144 = vadd.f32 %v1119, %v1143
    %1145 = vmatmul.f32.gmra.mxu0 %v1124
    %v1146 = vpop.f32.mrf.mxu0
    %v1147 = vadd.f32 %v1119, %v1146
    %1148 = vdwg.mxu0
    %v1149 = vmax.f32 %v1144, 0.0
    %v1150 = vmax.f32 %v1147, 0.0
    %v1151 = vld [vmem:[#allocation2 + $0x168] sm:$0xff]
    %v1152 = vld [vmem:[#allocation2 + $0x170] sm:$0xff]
    %v1153 = vld [vmem:[#allocation2 + $0x178] sm:$0xff]
    %v1154 = vld [vmem:[#allocation2 + $0x180] sm:$0xff]
    %v1156 = vsel %vm80, %v1149, 0
    %v1159 = vsel %vm80, %v1150, 0
    %1161 = vmatpush.msra.mxu0 0.0
    %1162 = vmatpush.msra.mxu0 0.0
    %1163 = vmatpush.msra.mxu0 0.0
    %1164 = vmatpush.msra.mxu0 0.0
    %1165 = vmatpush.msra.mxu0 0.0
    %1166 = vmatpush.msra.mxu0 0.0
    %1167 = vmatpush.msra.mxu0 0.0
    %1168 = vmatpush.msra.mxu0 0.0
    %1169 = vmatpush.msra.mxu0 0.0
    %1170 = vmatpush.msra.mxu0 0.0
    %1171 = vmatpush.msra.mxu0 0.0
    %1172 = vmatpush.msra.mxu0 0.0
    %1173 = vmatpush.msra.mxu0 %v1154
    %1174 = vmatpush.msra.mxu0 %v1153
    %1175 = vmatpush.msra.mxu0 %v1152
    %1176 = vmatpush.msra.mxu0 %v1151
    %1177 = vmatmul.f32.gmra.mxu0 %v1156
    %v1178 = vpop.f32.mrf.mxu0
    %v1179 = vadd.f32 0.0, %v1178
    %1180 = vmatmul.f32.gmra.mxu0 %v1159
    %v1181 = vpop.f32.mrf.mxu0
    %v1182 = vadd.f32 0.0, %v1181
    %1183 = vdwg.mxu0
    %v1184 = vld [vmem:[#allocation2 + $0x188] sm:$0x1]
    %v1185 = vperm.slane %v1184, 0
    %v1186 = vadd.f32 %v1179, %v1185
    %v1187 = vadd.f32 %v1182, %v1185
    %v1188 = vld [vmem:[%s4] sm:$0xff]
    %v1189 = vld [vmem:[%s4 + $0x8] sm:$0xff]
    %v1190 = vadd.f32 %v1188, %v1186
    %v1191 = vadd.f32 %v1189, %v1187
    %vm1192 = vcmask 23552
    %1193 = vst.msk [vmem:[%s6] sm:$0xff] %vm1192, %v1190
    %1194 = vst.msk [vmem:[%s6 + $0x8] sm:$0xff] %vm1192, %v1191
    // Predicated region
    $region30: #{tpu_custom_call.1} parent=1 // pred_check
      _
    $region31: #{tpu_custom_call.1} parent=1 // pred_check_branch
      %1196 = sbr.rel (0) target = $region33
    $region32: #{tpu_custom_call.1} parent=1 // pred_region
      _
    $region33: #{tpu_custom_call.1} parent=1 // pred_fallthru
      _
    // Predicated region
    $region34: #{tpu_custom_call.1} parent=1 // pred_check
      _
    $region35: #{tpu_custom_call.1} parent=1 // pred_check_branch
      %1198 = sbr.rel (0) target = $region37
    $region36: #{tpu_custom_call.1} parent=1 // pred_region
      _
    $region37: #{tpu_custom_call.1} parent=1 // pred_fallthru
      _
    %1199 = vsyncpa [#allocation3], 1

</llo_original>
